<compile_context>
chip_gen: v7x
topology: tpu7x:2x2x1
jax: 0.10.0
libtpu: 0.0.40
codegen_flags: <defaults>
</compile_context>

<pallas_src>
import jax
import jax.numpy as jnp
from jax import lax
from jax.experimental import pallas as pl
from jax.experimental.pallas import tpu as pltpu


def _mvgrl_kernel(adj_ref, dadj_ref, feat_ref, shuf_ref,
                  w1_ref, b1_ref, a1_ref,
                  w2_ref, b2_ref, a2_ref,
                  wd_ref, bd_ref,
                  logits_ref):
    f32 = jnp.float32
    adj = adj_ref[...]      # (N, N) normalized adjacency (norm='both')
    dadj = dadj_ref[...]    # (N, N) weighted diffusion adjacency (norm='none')
    feat = feat_ref[...]    # (N, F)
    shuf = shuf_ref[...]    # (N, F)
    w1, b1, a1 = w1_ref[...], b1_ref[...], a1_ref[...]
    w2, b2, a2 = w2_ref[...], b2_ref[...], a2_ref[...]
    wd = wd_ref[...]        # (D, D) bilinear weight
    bd = bd_ref[...]        # (1, 1) bilinear bias

    def graph_conv(a, x, w, b, alpha):
        # X @ W on the MXU, then A @ (XW); f32 accumulate.
        xw = lax.dot_general(x, w, (((1,), (0,)), ((), ())),
                             preferred_element_type=f32)
        h = lax.dot_general(a, xw, (((1,), (0,)), ((), ())),
                            preferred_element_type=f32) + b
        # PReLU with a single learned scalar alpha (broadcast from (1,1)).
        return jnp.where(h > 0, h, alpha * h)

    h1 = graph_conv(adj, feat, w1, b1, a1)   # encoder1(graph, feat)
    h2 = graph_conv(dadj, feat, w2, b2, a2)  # encoder2(diff_graph, feat)
    h3 = graph_conv(adj, shuf, w1, b1, a1)   # encoder1(graph, shuf_feat)
    h4 = graph_conv(dadj, shuf, w2, b2, a2)  # encoder2(diff_graph, shuf_feat)

    # AvgPooling over nodes + sigmoid  ->  (1, D) summaries.
    inv_n = 1.0 / adj_ref.shape[0]
    m1 = jnp.sum(h1, axis=0, keepdims=True) * inv_n
    m2 = jnp.sum(h2, axis=0, keepdims=True) * inv_n
    c1 = 1.0 / (1.0 + jnp.exp(-m1))
    c2 = 1.0 / (1.0 + jnp.exp(-m2))

    # q = W_bilinear @ c, laid out as a (1, D) row: q[0, j] = sum_k W[j, k] c[k]
    q1 = lax.dot_general(c1, wd, (((1,), (1,)), ((), ())),
                         preferred_element_type=f32)
    q2 = lax.dot_general(c2, wd, (((1,), (1,)), ((), ())),
                         preferred_element_type=f32)

    def score_row(q, h):
        # (1, N): row[0, n] = sum_j q[0, j] * h[n, j]  (= h @ W_bil @ c + b)
        return lax.dot_general(q, h, (((1,), (1,)), ((), ())),
                               preferred_element_type=f32) + bd

    # torch.cat((sc_1, sc_2, sc_3, sc_4)) row order.
    logits = jnp.concatenate(
        [score_row(q1, h2),   # sc_1 = fn(h2, c1)
         score_row(q2, h1),   # sc_2 = fn(h1, c2)
         score_row(q1, h4),   # sc_3 = fn(h4, c1)
         score_row(q2, h3)],  # sc_4 = fn(h3, c2)
        axis=0)
    logits_ref[...] = logits.astype(logits_ref.dtype)


def mvgrl_forward(adj_norm, diff_adj, feat, shuf_feat, params):
    """Fused MVGRL forward: returns logits of shape (4 * num_nodes,)."""
    N, _ = feat.shape
    D = params["w1"].shape[1]

    args = (
        adj_norm, diff_adj, feat, shuf_feat,
        params["w1"], params["b1"].reshape(1, D), params["a1"].reshape(1, 1),
        params["w2"], params["b2"].reshape(1, D), params["a2"].reshape(1, 1),
        params["wd"], params["bd"].reshape(1, 1),
    )
    vmem = lambda: pl.BlockSpec(memory_space=pltpu.MemorySpace.VMEM)

    logits2d = pl.pallas_call(
        _mvgrl_kernel,
        out_shape=jax.ShapeDtypeStruct((4, N), jnp.float32),
        in_specs=[vmem() for _ in args],
        out_specs=vmem(),
    )(*args)
    return logits2d.reshape(-1)


if __name__ == "__main__":
    N, F, D = 128, 32, 128   # num_nodes, in_dim, out_dim (lane-dense D)

    key = jax.random.PRNGKey(0)
    (k_adj, k_dadj, k_feat, k_perm,
     k_w1, k_b1, k_w2, k_b2, k_wd, k_bd) = jax.random.split(key, 10)

    # --- graph preprocessing (plain JAX; densified adjacency) ---
    a = (jax.random.uniform(k_adj, (N, N)) < 0.1).astype(jnp.float32)
    a = jnp.maximum(a, a.T)                                         # undirected
    a = jnp.clip(a + jnp.eye(N, dtype=jnp.float32), 0.0, 1.0)       # self-loops
    deg = a.sum(axis=1)
    d_inv_sqrt = 1.0 / jnp.sqrt(deg)
    adj_norm = a * d_inv_sqrt[:, None] * d_inv_sqrt[None, :]        # norm='both'

    # diffusion (e.g. PPR) graph is dense with edge weights; norm='none'
    diff_adj = jax.random.uniform(k_dadj, (N, N), jnp.float32) * 0.05

    feat = jax.random.normal(k_feat, (N, F), jnp.float32)
    shuf_feat = feat[jax.random.permutation(k_perm, N)]

    # --- parameters (GraphConv / PReLU / Bilinear shapes) ---
    def glorot(k, shape):
        lim = float(jnp.sqrt(6.0 / (shape[0] + shape[1])))
        return jax.random.uniform(k, shape, jnp.float32, -lim, lim)

    lim_d = 1.0 / float(jnp.sqrt(jnp.float32(D)))
    params = dict(
        w1=glorot(k_w1, (F, D)),
        b1=jax.random.normal(k_b1, (D,), jnp.float32) * 0.01,
        a1=jnp.array([0.25], jnp.float32),          # PReLU alpha (encoder1)
        w2=glorot(k_w2, (F, D)),
        b2=jax.random.normal(k_b2, (D,), jnp.float32) * 0.01,
        a2=jnp.array([0.25], jnp.float32),          # PReLU alpha (encoder2)
        wd=jax.random.uniform(k_wd, (D, D), jnp.float32, -lim_d, lim_d),
        bd=jax.random.uniform(k_bd, (1,), jnp.float32, -lim_d, lim_d),
    )

    logits = mvgrl_forward(adj_norm, diff_adj, feat, shuf_feat, params)
    logits = jax.block_until_ready(logits)

    # --- pure-JAX reference (same math as PyTorch MVGRL.forward) ---
    hp = lax.Precision.HIGHEST

    def conv_ref(a_, x, w, b, alpha):
        h = jnp.dot(a_, jnp.dot(x, w, precision=hp), precision=hp) + b
        return jnp.where(h > 0, h, alpha * h)

    h1 = conv_ref(adj_norm, feat, params["w1"], params["b1"], params["a1"])
    h2 = conv_ref(diff_adj, feat, params["w2"], params["b2"], params["a2"])
    h3 = conv_ref(adj_norm, shuf_feat, params["w1"], params["b1"], params["a1"])
    h4 = conv_ref(diff_adj, shuf_feat, params["w2"], params["b2"], params["a2"])
    c1 = jax.nn.sigmoid(h1.mean(axis=0))
    c2 = jax.nn.sigmoid(h2.mean(axis=0))
    wd, bd = params["wd"], params["bd"]
    sc1 = jnp.dot(h2, jnp.dot(wd, c1, precision=hp), precision=hp) + bd
    sc2 = jnp.dot(h1, jnp.dot(wd, c2, precision=hp), precision=hp) + bd
    sc3 = jnp.dot(h4, jnp.dot(wd, c1, precision=hp), precision=hp) + bd
    sc4 = jnp.dot(h3, jnp.dot(wd, c2, precision=hp), precision=hp) + bd
    ref = jnp.concatenate([sc1, sc2, sc3, sc4])

    assert logits.shape == (4 * N,)
    assert jnp.allclose(logits, ref, atol=2e-2, rtol=2e-2)

    print("KERNEL_OK")
</pallas_src>

<mosaic_0001>
module attributes {stable_mosaic.version = 11 : i64} {
  func.func @_mvgrl_kernel(%arg0: memref<128x128xf32, #tpu.memory_space<vmem>>, %arg1: memref<128x128xf32, #tpu.memory_space<vmem>>, %arg2: memref<128x32xf32, #tpu.memory_space<vmem>>, %arg3: memref<128x32xf32, #tpu.memory_space<vmem>>, %arg4: memref<32x128xf32, #tpu.memory_space<vmem>>, %arg5: memref<1x128xf32, #tpu.memory_space<vmem>>, %arg6: memref<1x1xf32, #tpu.memory_space<vmem>>, %arg7: memref<32x128xf32, #tpu.memory_space<vmem>>, %arg8: memref<1x128xf32, #tpu.memory_space<vmem>>, %arg9: memref<1x1xf32, #tpu.memory_space<vmem>>, %arg10: memref<128x128xf32, #tpu.memory_space<vmem>>, %arg11: memref<1x1xf32, #tpu.memory_space<vmem>>, %arg12: memref<4x128xf32, #tpu.memory_space<vmem>>) attributes {dimension_semantics = [], scalar_prefetch = 0 : i64, scratch_operands = 0 : i64, tpu.core_type = #tpu.core_type<tc>} {
    %c0 = arith.constant 0 : index
    %c0_0 = arith.constant 0 : index
    %0 = vector.load %arg0[%c0, %c0_0] : memref<128x128xf32, #tpu.memory_space<vmem>>, vector<128x128xf32>
    %c0_1 = arith.constant 0 : index
    %c0_2 = arith.constant 0 : index
    %1 = vector.load %arg1[%c0_1, %c0_2] : memref<128x128xf32, #tpu.memory_space<vmem>>, vector<128x128xf32>
    %c0_3 = arith.constant 0 : index
    %c0_4 = arith.constant 0 : index
    %2 = vector.load %arg2[%c0_3, %c0_4] : memref<128x32xf32, #tpu.memory_space<vmem>>, vector<128x32xf32>
    %c0_5 = arith.constant 0 : index
    %c0_6 = arith.constant 0 : index
    %3 = vector.load %arg3[%c0_5, %c0_6] : memref<128x32xf32, #tpu.memory_space<vmem>>, vector<128x32xf32>
    %c0_7 = arith.constant 0 : index
    %c0_8 = arith.constant 0 : index
    %4 = vector.load %arg4[%c0_7, %c0_8] : memref<32x128xf32, #tpu.memory_space<vmem>>, vector<32x128xf32>
    %c0_9 = arith.constant 0 : index
    %c0_10 = arith.constant 0 : index
    %5 = vector.load %arg5[%c0_9, %c0_10] : memref<1x128xf32, #tpu.memory_space<vmem>>, vector<1x128xf32>
    %c0_11 = arith.constant 0 : index
    %c0_12 = arith.constant 0 : index
    %6 = vector.load %arg6[%c0_11, %c0_12] : memref<1x1xf32, #tpu.memory_space<vmem>>, vector<1x1xf32>
    %c0_13 = arith.constant 0 : index
    %c0_14 = arith.constant 0 : index
    %7 = vector.load %arg7[%c0_13, %c0_14] : memref<32x128xf32, #tpu.memory_space<vmem>>, vector<32x128xf32>
    %c0_15 = arith.constant 0 : index
    %c0_16 = arith.constant 0 : index
    %8 = vector.load %arg8[%c0_15, %c0_16] : memref<1x128xf32, #tpu.memory_space<vmem>>, vector<1x128xf32>
    %c0_17 = arith.constant 0 : index
    %c0_18 = arith.constant 0 : index
    %9 = vector.load %arg9[%c0_17, %c0_18] : memref<1x1xf32, #tpu.memory_space<vmem>>, vector<1x1xf32>
    %c0_19 = arith.constant 0 : index
    %c0_20 = arith.constant 0 : index
    %10 = vector.load %arg10[%c0_19, %c0_20] : memref<128x128xf32, #tpu.memory_space<vmem>>, vector<128x128xf32>
    %c0_21 = arith.constant 0 : index
    %c0_22 = arith.constant 0 : index
    %11 = vector.load %arg11[%c0_21, %c0_22] : memref<1x1xf32, #tpu.memory_space<vmem>>, vector<1x1xf32>
    %cst = arith.constant dense<0.000000e+00> : vector<128x128xf32>
    %12 = tpu.matmul %2, %4, %cst {dimension_numbers = #tpu.dot_dimension_numbers<[1], [0], [0], [1], [0, 0, 1, 1], [], []>} : vector<128x32xf32>, vector<32x128xf32>, vector<128x128xf32> -> vector<128x128xf32>
    %cst_23 = arith.constant dense<0.000000e+00> : vector<128x128xf32>
    %13 = tpu.matmul %0, %12, %cst_23 {dimension_numbers = #tpu.dot_dimension_numbers<[1], [0], [0], [1], [0, 0, 1, 1], [], []>} : vector<128x128xf32>, vector<128x128xf32>, vector<128x128xf32> -> vector<128x128xf32>
    %14 = vector.broadcast %5 : vector<1x128xf32> to vector<128x128xf32>
    %15 = arith.addf %13, %14 : vector<128x128xf32>
    %cst_24 = arith.constant 0.000000e+00 : f32
    %16 = vector.broadcast %cst_24 : f32 to vector<128x128xf32>
    %17 = arith.cmpf ogt, %15, %16 : vector<128x128xf32>
    %18 = vector.broadcast %6 : vector<1x1xf32> to vector<128x128xf32>
    %19 = arith.mulf %18, %15 : vector<128x128xf32>
    %20 = arith.select %17, %15, %19 : vector<128x128xi1>, vector<128x128xf32>
    %cst_25 = arith.constant dense<0.000000e+00> : vector<128x128xf32>
    %21 = tpu.matmul %2, %7, %cst_25 {dimension_numbers = #tpu.dot_dimension_numbers<[1], [0], [0], [1], [0, 0, 1, 1], [], []>} : vector<128x32xf32>, vector<32x128xf32>, vector<128x128xf32> -> vector<128x128xf32>
    %cst_26 = arith.constant dense<0.000000e+00> : vector<128x128xf32>
    %22 = tpu.matmul %1, %21, %cst_26 {dimension_numbers = #tpu.dot_dimension_numbers<[1], [0], [0], [1], [0, 0, 1, 1], [], []>} : vector<128x128xf32>, vector<128x128xf32>, vector<128x128xf32> -> vector<128x128xf32>
    %23 = vector.broadcast %8 : vector<1x128xf32> to vector<128x128xf32>
    %24 = arith.addf %22, %23 : vector<128x128xf32>
    %cst_27 = arith.constant 0.000000e+00 : f32
    %25 = vector.broadcast %cst_27 : f32 to vector<128x128xf32>
    %26 = arith.cmpf ogt, %24, %25 : vector<128x128xf32>
    %27 = vector.broadcast %9 : vector<1x1xf32> to vector<128x128xf32>
    %28 = arith.mulf %27, %24 : vector<128x128xf32>
    %29 = arith.select %26, %24, %28 : vector<128x128xi1>, vector<128x128xf32>
    %cst_28 = arith.constant dense<0.000000e+00> : vector<128x128xf32>
    %30 = tpu.matmul %3, %4, %cst_28 {dimension_numbers = #tpu.dot_dimension_numbers<[1], [0], [0], [1], [0, 0, 1, 1], [], []>} : vector<128x32xf32>, vector<32x128xf32>, vector<128x128xf32> -> vector<128x128xf32>
    %cst_29 = arith.constant dense<0.000000e+00> : vector<128x128xf32>
    %31 = tpu.matmul %0, %30, %cst_29 {dimension_numbers = #tpu.dot_dimension_numbers<[1], [0], [0], [1], [0, 0, 1, 1], [], []>} : vector<128x128xf32>, vector<128x128xf32>, vector<128x128xf32> -> vector<128x128xf32>
    %32 = vector.broadcast %5 : vector<1x128xf32> to vector<128x128xf32>
    %33 = arith.addf %31, %32 : vector<128x128xf32>
    %cst_30 = arith.constant 0.000000e+00 : f32
    %34 = vector.broadcast %cst_30 : f32 to vector<128x128xf32>
    %35 = arith.cmpf ogt, %33, %34 : vector<128x128xf32>
    %36 = vector.broadcast %6 : vector<1x1xf32> to vector<128x128xf32>
    %37 = arith.mulf %36, %33 : vector<128x128xf32>
    %38 = arith.select %35, %33, %37 : vector<128x128xi1>, vector<128x128xf32>
    %cst_31 = arith.constant dense<0.000000e+00> : vector<128x128xf32>
    %39 = tpu.matmul %3, %7, %cst_31 {dimension_numbers = #tpu.dot_dimension_numbers<[1], [0], [0], [1], [0, 0, 1, 1], [], []>} : vector<128x32xf32>, vector<32x128xf32>, vector<128x128xf32> -> vector<128x128xf32>
    %cst_32 = arith.constant dense<0.000000e+00> : vector<128x128xf32>
    %40 = tpu.matmul %1, %39, %cst_32 {dimension_numbers = #tpu.dot_dimension_numbers<[1], [0], [0], [1], [0, 0, 1, 1], [], []>} : vector<128x128xf32>, vector<128x128xf32>, vector<128x128xf32> -> vector<128x128xf32>
    %41 = vector.broadcast %8 : vector<1x128xf32> to vector<128x128xf32>
    %42 = arith.addf %40, %41 : vector<128x128xf32>
    %cst_33 = arith.constant 0.000000e+00 : f32
    %43 = vector.broadcast %cst_33 : f32 to vector<128x128xf32>
    %44 = arith.cmpf ogt, %42, %43 : vector<128x128xf32>
    %45 = vector.broadcast %9 : vector<1x1xf32> to vector<128x128xf32>
    %46 = arith.mulf %45, %42 : vector<128x128xf32>
    %47 = arith.select %44, %42, %46 : vector<128x128xi1>, vector<128x128xf32>
    %cst_34 = arith.constant dense<0.000000e+00> : vector<128xf32>
    %48 = vector.multi_reduction <add>, %20, %cst_34 [0] : vector<128x128xf32> to vector<128xf32>
    %49 = vector.shape_cast %48 : vector<128xf32> to vector<1x128xf32>
    %cst_35 = arith.constant 7.812500e-03 : f32
    %50 = vector.broadcast %cst_35 : f32 to vector<1x128xf32>
    %51 = arith.mulf %49, %50 : vector<1x128xf32>
    %cst_36 = arith.constant dense<0.000000e+00> : vector<128xf32>
    %52 = vector.multi_reduction <add>, %29, %cst_36 [0] : vector<128x128xf32> to vector<128xf32>
    %53 = vector.shape_cast %52 : vector<128xf32> to vector<1x128xf32>
    %cst_37 = arith.constant 7.812500e-03 : f32
    %54 = vector.broadcast %cst_37 : f32 to vector<1x128xf32>
    %55 = arith.mulf %53, %54 : vector<1x128xf32>
    %cst_38 = arith.constant 0.000000e+00 : f32
    %56 = vector.broadcast %cst_38 : f32 to vector<1x128xf32>
    %57 = arith.subf %56, %51 : vector<1x128xf32>
    %58 = math.exp %57 : vector<1x128xf32>
    %cst_39 = arith.constant 1.000000e+00 : f32
    %59 = vector.broadcast %cst_39 : f32 to vector<1x128xf32>
    %60 = arith.addf %59, %58 : vector<1x128xf32>
    %cst_40 = arith.constant 1.000000e+00 : f32
    %61 = vector.broadcast %cst_40 : f32 to vector<1x128xf32>
    %62 = arith.divf %61, %60 : vector<1x128xf32>
    %cst_41 = arith.constant 0.000000e+00 : f32
    %63 = vector.broadcast %cst_41 : f32 to vector<1x128xf32>
    %64 = arith.subf %63, %55 : vector<1x128xf32>
    %65 = math.exp %64 : vector<1x128xf32>
    %cst_42 = arith.constant 1.000000e+00 : f32
    %66 = vector.broadcast %cst_42 : f32 to vector<1x128xf32>
    %67 = arith.addf %66, %65 : vector<1x128xf32>
    %cst_43 = arith.constant 1.000000e+00 : f32
    %68 = vector.broadcast %cst_43 : f32 to vector<1x128xf32>
    %69 = arith.divf %68, %67 : vector<1x128xf32>
    %cst_44 = arith.constant dense<0.000000e+00> : vector<1x128xf32>
    %70 = tpu.matmul %62, %10, %cst_44 {dimension_numbers = #tpu.dot_dimension_numbers<[1], [1], [0], [0], [0, 0, 1, 0], [], []>} : vector<1x128xf32>, vector<128x128xf32>, vector<1x128xf32> -> vector<1x128xf32>
    %cst_45 = arith.constant dense<0.000000e+00> : vector<1x128xf32>
    %71 = tpu.matmul %69, %10, %cst_45 {dimension_numbers = #tpu.dot_dimension_numbers<[1], [1], [0], [0], [0, 0, 1, 0], [], []>} : vector<1x128xf32>, vector<128x128xf32>, vector<1x128xf32> -> vector<1x128xf32>
    %cst_46 = arith.constant dense<0.000000e+00> : vector<1x128xf32>
    %72 = tpu.matmul %70, %29, %cst_46 {dimension_numbers = #tpu.dot_dimension_numbers<[1], [1], [0], [0], [0, 0, 1, 0], [], []>} : vector<1x128xf32>, vector<128x128xf32>, vector<1x128xf32> -> vector<1x128xf32>
    %73 = vector.broadcast %11 : vector<1x1xf32> to vector<1x128xf32>
    %74 = arith.addf %72, %73 : vector<1x128xf32>
    %cst_47 = arith.constant dense<0.000000e+00> : vector<1x128xf32>
    %75 = tpu.matmul %71, %20, %cst_47 {dimension_numbers = #tpu.dot_dimension_numbers<[1], [1], [0], [0], [0, 0, 1, 0], [], []>} : vector<1x128xf32>, vector<128x128xf32>, vector<1x128xf32> -> vector<1x128xf32>
    %76 = vector.broadcast %11 : vector<1x1xf32> to vector<1x128xf32>
    %77 = arith.addf %75, %76 : vector<1x128xf32>
    %cst_48 = arith.constant dense<0.000000e+00> : vector<1x128xf32>
    %78 = tpu.matmul %70, %47, %cst_48 {dimension_numbers = #tpu.dot_dimension_numbers<[1], [1], [0], [0], [0, 0, 1, 0], [], []>} : vector<1x128xf32>, vector<128x128xf32>, vector<1x128xf32> -> vector<1x128xf32>
    %79 = vector.broadcast %11 : vector<1x1xf32> to vector<1x128xf32>
    %80 = arith.addf %78, %79 : vector<1x128xf32>
    %cst_49 = arith.constant dense<0.000000e+00> : vector<1x128xf32>
    %81 = tpu.matmul %71, %38, %cst_49 {dimension_numbers = #tpu.dot_dimension_numbers<[1], [1], [0], [0], [0, 0, 1, 0], [], []>} : vector<1x128xf32>, vector<128x128xf32>, vector<1x128xf32> -> vector<1x128xf32>
    %82 = vector.broadcast %11 : vector<1x1xf32> to vector<1x128xf32>
    %83 = arith.addf %81, %82 : vector<1x128xf32>
    %84 = tpu.concatenate %74, %77, %80, %83 in 0 : vector<1x128xf32>, vector<1x128xf32>, vector<1x128xf32>, vector<1x128xf32> -> vector<4x128xf32>
    %c0_50 = arith.constant 0 : index
    %c0_51 = arith.constant 0 : index
    %85 = vector.load %arg12[%c0_50, %c0_51] : memref<4x128xf32, #tpu.memory_space<vmem>>, vector<4x128xf32>
    tpu.vector_store %arg12[%c0_50, %c0_51], %84 {strides = array<i32>} : memref<4x128xf32, #tpu.memory_space<vmem>>, vector<4x128xf32>,
    return
  }
}

</mosaic_0001>

<llo_original>
// kernel: tpu_custom_call.1
$region0: #{tpu_custom_call.1}
  #allocation0 [shape = 'u32[]', space=smem, size = 0x4, offset = 0x4, fixed_abs, tag = 'smem constant byte address 0x4 - core index']
  #allocation1 [shape = 'u32[144,128]{1,0:T(1,128)}', space=vmem, size = 0x12000, scoped, tag = 'internal scratch']
  #allocation2 [shape = 'f32[1,1]{1,0:T(1,128)S(1)}', space=vmem, size = 0x200, scoped, tag = 'scoped memory for tpu_custom_call.1']
  #allocation3 [shape = 'f32[1,1]{1,0:T(1,128)S(1)}', space=vmem, size = 0x200, scoped, tag = 'scoped memory for tpu_custom_call.1']
  #allocation4 [shape = 'f32[1,1]{1,0:T(1,128)S(1)}', space=vmem, size = 0x200, scoped, tag = 'scoped memory for tpu_custom_call.1']
  %s0 = inlined_call_operand.vmem [shape: f32[128,128], index: 0, kind: input, shape index: {}]
  %s1 = inlined_call_operand.vmem [shape: f32[128,128], index: 1, kind: input, shape index: {}]
  %s2 = inlined_call_operand.vmem [shape: f32[128,32], index: 2, kind: input, shape index: {}]
  %s3 = inlined_call_operand.vmem [shape: f32[128,32], index: 3, kind: input, shape index: {}]
  %s4 = inlined_call_operand.vmem [shape: f32[32,128], index: 4, kind: input, shape index: {}]
  %s5 = inlined_call_operand.vmem [shape: f32[1,128], index: 5, kind: input, shape index: {}]
  %s6 = inlined_call_operand.<no memory space> [shape: f32[1,1], index: 6, kind: input, shape index: {}]
  %s7 = inlined_call_operand.vmem [shape: f32[32,128], index: 7, kind: input, shape index: {}]
  %s8 = inlined_call_operand.vmem [shape: f32[1,128], index: 8, kind: input, shape index: {}]
  %s9 = inlined_call_operand.<no memory space> [shape: f32[1,1], index: 9, kind: input, shape index: {}]
  %s10 = inlined_call_operand.hbm [shape: f32[128,128], index: 10, kind: input, shape index: {}]
  %s11 = inlined_call_operand.<no memory space> [shape: f32[1,1], index: 11, kind: input, shape index: {}]
  %s12 = inlined_call_operand.hbm [shape: f32[4,128], index: 12, kind: output, shape index: {}]
  %s13 = sld [smem:[#allocation0]]
  $region62: #{tpu_custom_call.1} parent=0
    _
  %s15 = ssub.s32 1, %s13
  %s16 = scalar_select 0, %s15, %s13
  %v17 = vstv %s6
  %18 = vst [vmem:[#allocation2] sm:$0x1] %v17
  %v19 = vstv %s9
  %20 = vst [vmem:[#allocation3] sm:$0x1] %v19
  %v21 = vstv %s11
  %22 = vst [vmem:[#allocation4] sm:$0x1] %v21
  $region1: #{tpu_custom_call.1} parent=0
    #allocation5 [shape = 'u8[65536]{0}', space=vmem, size = 0x10000, scoped, tag = 'input window, operand 10, single buffered']
    #allocation6 [shape = 's32[1]{0}', space=sflag, size = 0x4, scoped, tag = 'scoped memory for tpu_custom_call.1']
    #allocation7 [shape = 's32[1]{0}', space=sflag, size = 0x4, scoped, tag = 'scoped memory for tpu_custom_call.1']
    #allocation8 [shape = 'u8[2048]{0}', space=vmem, size = 0x800, scoped, tag = 'output window, operand 0, single buffered']
    %23 = vsyncpa [#allocation6], 0
    %24 = vsyncpa [#allocation7], 0
    // Predicated region
    $region2: #{tpu_custom_call.1} parent=1 // pred_check
      _
    $region3: #{tpu_custom_call.1} parent=1 // pred_check_branch
      %26 = sbr.rel (0) target = $region5
    $region4: #{tpu_custom_call.1} parent=1 // pred_region
      _
    $region5: #{tpu_custom_call.1} parent=1 // pred_fallthru
      _
    // Predicated region
    $region6: #{tpu_custom_call.1} parent=1 // pred_check
      _
    $region7: #{tpu_custom_call.1} parent=1 // pred_check_branch
      %28 = sbr.rel (0) target = $region9
    $region8: #{tpu_custom_call.1} parent=1 // pred_region
      _
    $region9: #{tpu_custom_call.1} parent=1 // pred_fallthru
      _
    // Predicated region
    $region10: #{tpu_custom_call.1} parent=1 // pred_check
      _
    $region11: #{tpu_custom_call.1} parent=1 // pred_check_branch
      %30 = sbr.rel (0) target = $region13
    $region12: #{tpu_custom_call.1} parent=1 // pred_region
      _
    $region13: #{tpu_custom_call.1} parent=1 // pred_fallthru
      _
    // Predicated region
    $region14: #{tpu_custom_call.1} parent=1 // pred_check
      _
    $region15: #{tpu_custom_call.1} parent=1 // pred_check_branch
      %32 = sbr.rel (0) target = $region17
    $region16: #{tpu_custom_call.1} parent=1 // pred_region
      _
    $region17: #{tpu_custom_call.1} parent=1 // pred_fallthru
      _
    // Predicated region
    $region18: #{tpu_custom_call.1} parent=1 // pred_check
      _
    $region19: #{tpu_custom_call.1} parent=1 // pred_check_branch
      %34 = sbr.rel (0) target = $region21
    $region20: #{tpu_custom_call.1} parent=1 // pred_region
      _
    $region21: #{tpu_custom_call.1} parent=1 // pred_fallthru
      _
    // Predicated region
    $region22: #{tpu_custom_call.1} parent=1 // pred_check
      _
    $region23: #{tpu_custom_call.1} parent=1 // pred_check_branch
      %36 = sbr.rel (0) target = $region25
    $region24: #{tpu_custom_call.1} parent=1 // pred_region
      _
    $region25: #{tpu_custom_call.1} parent=1 // pred_fallthru
      _
    // Predicated region
    $region26: #{tpu_custom_call.1} parent=1 // pred_check
      _
    $region27: #{tpu_custom_call.1} parent=1 // pred_check_branch
      %38 = sbr.rel (0) target = $region29
    $region28: #{tpu_custom_call.1} parent=1 // pred_region
      _
    $region29: #{tpu_custom_call.1} parent=1 // pred_fallthru
      _
    // Predicated region
    $region30: #{tpu_custom_call.1} parent=1 // pred_check
      _
    $region31: #{tpu_custom_call.1} parent=1 // pred_check_branch
      %40 = sbr.rel (0) target = $region33
    $region32: #{tpu_custom_call.1} parent=1 // pred_region
      _
    $region33: #{tpu_custom_call.1} parent=1 // pred_fallthru
      _
    // Predicated region
    $region34: #{tpu_custom_call.1} parent=1 // pred_check
      _
    $region35: #{tpu_custom_call.1} parent=1 // pred_check_branch
      %42 = sbr.rel (0) target = $region37
    $region36: #{tpu_custom_call.1} parent=1 // pred_region
      _
    $region37: #{tpu_custom_call.1} parent=1 // pred_fallthru
      _
    // Predicated region
    $region38: #{tpu_custom_call.1} parent=1 // pred_check
      _
    $region39: #{tpu_custom_call.1} parent=1 // pred_check_branch
      %44 = sbr.rel (0) target = $region41
    $region40: #{tpu_custom_call.1} parent=1 // pred_region
      _
    $region41: #{tpu_custom_call.1} parent=1 // pred_fallthru
      _
    // Predicated region
    $region42: #{tpu_custom_call.1} parent=1 // pred_check
      _
    $region43: #{tpu_custom_call.1} parent=1 // pred_check_branch
      %46 = sbr.rel (0) target = $region45
    $region44: #{tpu_custom_call.1} parent=1 // pred_region
      %s48 = ssub.s32 2048, 2048
      %49 = vsyncadd [#allocation6], %s48
      %s50 = sshll.u32 [#allocation5], 4
      %s51 = int_to_ptr.vmem [resolvable:$true] %s50
      %56 = dma.hbm_to_vmem [thread:$0]  %s10, 2048, %s51, [#allocation6], 128, 128, 8
    $region45: #{tpu_custom_call.1} parent=1 // pred_fallthru
      _
    // Predicated region
    $region46: #{tpu_custom_call.1} parent=1 // pred_check
      _
    $region47: #{tpu_custom_call.1} parent=1 // pred_check_branch
      %58 = sbr.rel (0) target = $region49
    $region48: #{tpu_custom_call.1} parent=1 // pred_region
      _
    $region49: #{tpu_custom_call.1} parent=1 // pred_fallthru
      _
    // Predicated region
    $region50: #{tpu_custom_call.1} parent=1 // pred_check
      _
    $region51: #{tpu_custom_call.1} parent=1 // pred_check_branch
      %60 = sbr.rel (0) target = $region53
    $region52: #{tpu_custom_call.1} parent=1 // pred_region
      %61 = dma.done [#allocation6], 2048
    $region53: #{tpu_custom_call.1} parent=1 // pred_fallthru
      _
    %v62 = vld [vmem:[%s0] sm:$0xff]
    %v63 = vld [vmem:[%s0 + $0x8] sm:$0xff]
    %v64 = vld [vmem:[%s0 + $0x10] sm:$0xff]
    %v65 = vld [vmem:[%s0 + $0x18] sm:$0xff]
    %v66 = vld [vmem:[%s0 + $0x20] sm:$0xff]
    %v67 = vld [vmem:[%s0 + $0x28] sm:$0xff]
    %v68 = vld [vmem:[%s0 + $0x30] sm:$0xff]
    %v69 = vld [vmem:[%s0 + $0x38] sm:$0xff]
    %v70 = vld [vmem:[%s0 + $0x40] sm:$0xff]
    %v71 = vld [vmem:[%s0 + $0x48] sm:$0xff]
    %v72 = vld [vmem:[%s0 + $0x50] sm:$0xff]
    %v73 = vld [vmem:[%s0 + $0x58] sm:$0xff]
    %v74 = vld [vmem:[%s0 + $0x60] sm:$0xff]
    %v75 = vld [vmem:[%s0 + $0x68] sm:$0xff]
    %v76 = vld [vmem:[%s0 + $0x70] sm:$0xff]
    %v77 = vld [vmem:[%s0 + $0x78] sm:$0xff]
    %v78 = vld [vmem:[%s1] sm:$0xff]
    %v79 = vld [vmem:[%s1 + $0x8] sm:$0xff]
    %v80 = vld [vmem:[%s1 + $0x10] sm:$0xff]
    %v81 = vld [vmem:[%s1 + $0x18] sm:$0xff]
    %v82 = vld [vmem:[%s1 + $0x20] sm:$0xff]
    %v83 = vld [vmem:[%s1 + $0x28] sm:$0xff]
    %v84 = vld [vmem:[%s1 + $0x30] sm:$0xff]
    %v85 = vld [vmem:[%s1 + $0x38] sm:$0xff]
    %v86 = vld [vmem:[%s1 + $0x40] sm:$0xff]
    %v87 = vld [vmem:[%s1 + $0x48] sm:$0xff]
    %v88 = vld [vmem:[%s1 + $0x50] sm:$0xff]
    %v89 = vld [vmem:[%s1 + $0x58] sm:$0xff]
    %v90 = vld [vmem:[%s1 + $0x60] sm:$0xff]
    %v91 = vld [vmem:[%s1 + $0x68] sm:$0xff]
    %v92 = vld [vmem:[%s1 + $0x70] sm:$0xff]
    %v93 = vld [vmem:[%s1 + $0x78] sm:$0xff]
    %v94 = vld [vmem:[%s2] sm:$0xff]
    %v95 = vld [vmem:[%s2 + $0x8] sm:$0xff]
    %v96 = vld [vmem:[%s2 + $0x10] sm:$0xff]
    %v97 = vld [vmem:[%s2 + $0x18] sm:$0xff]
    %v98 = vld [vmem:[%s2 + $0x20] sm:$0xff]
    %v99 = vld [vmem:[%s2 + $0x28] sm:$0xff]
    %v100 = vld [vmem:[%s2 + $0x30] sm:$0xff]
    %v101 = vld [vmem:[%s2 + $0x38] sm:$0xff]
    %v102 = vld [vmem:[%s2 + $0x40] sm:$0xff]
    %v103 = vld [vmem:[%s2 + $0x48] sm:$0xff]
    %v104 = vld [vmem:[%s2 + $0x50] sm:$0xff]
    %v105 = vld [vmem:[%s2 + $0x58] sm:$0xff]
    %v106 = vld [vmem:[%s2 + $0x60] sm:$0xff]
    %v107 = vld [vmem:[%s2 + $0x68] sm:$0xff]
    %v108 = vld [vmem:[%s2 + $0x70] sm:$0xff]
    %v109 = vld [vmem:[%s2 + $0x78] sm:$0xff]
    %v110 = vld [vmem:[%s3] sm:$0xff]
    %v111 = vld [vmem:[%s3 + $0x8] sm:$0xff]
    %v112 = vld [vmem:[%s3 + $0x10] sm:$0xff]
    %v113 = vld [vmem:[%s3 + $0x18] sm:$0xff]
    %v114 = vld [vmem:[%s3 + $0x20] sm:$0xff]
    %v115 = vld [vmem:[%s3 + $0x28] sm:$0xff]
    %v116 = vld [vmem:[%s3 + $0x30] sm:$0xff]
    %v117 = vld [vmem:[%s3 + $0x38] sm:$0xff]
    %v118 = vld [vmem:[%s3 + $0x40] sm:$0xff]
    %v119 = vld [vmem:[%s3 + $0x48] sm:$0xff]
    %v120 = vld [vmem:[%s3 + $0x50] sm:$0xff]
    %v121 = vld [vmem:[%s3 + $0x58] sm:$0xff]
    %v122 = vld [vmem:[%s3 + $0x60] sm:$0xff]
    %v123 = vld [vmem:[%s3 + $0x68] sm:$0xff]
    %v124 = vld [vmem:[%s3 + $0x70] sm:$0xff]
    %v125 = vld [vmem:[%s3 + $0x78] sm:$0xff]
    %v126 = vld [vmem:[%s4] sm:$0xff]
    %v127 = vld [vmem:[%s4 + $0x8] sm:$0xff]
    %v128 = vld [vmem:[%s4 + $0x10] sm:$0xff]
    %v129 = vld [vmem:[%s4 + $0x18] sm:$0xff]
    %v130 = vld [vmem:[%s5] sm:$0x1]
    %v131 = vld [vmem:[#allocation2] sm:$0x1]
    %v132 = vld [vmem:[%s7] sm:$0xff]
    %v133 = vld [vmem:[%s7 + $0x8] sm:$0xff]
    %v134 = vld [vmem:[%s7 + $0x10] sm:$0xff]
    %v135 = vld [vmem:[%s7 + $0x18] sm:$0xff]
    %v136 = vld [vmem:[%s8] sm:$0x1]
    %v137 = vld [vmem:[#allocation3] sm:$0x1]
    %v138 = vld [vmem:[#allocation5] sm:$0xff]
    %v139 = vld [vmem:[#allocation5 + $0x8] sm:$0xff]
    %v140 = vld [vmem:[#allocation5 + $0x10] sm:$0xff]
    %v141 = vld [vmem:[#allocation5 + $0x18] sm:$0xff]
    %v142 = vld [vmem:[#allocation5 + $0x20] sm:$0xff]
    %v143 = vld [vmem:[#allocation5 + $0x28] sm:$0xff]
    %v144 = vld [vmem:[#allocation5 + $0x30] sm:$0xff]
    %v145 = vld [vmem:[#allocation5 + $0x38] sm:$0xff]
    %v146 = vld [vmem:[#allocation5 + $0x40] sm:$0xff]
    %v147 = vld [vmem:[#allocation5 + $0x48] sm:$0xff]
    %v148 = vld [vmem:[#allocation5 + $0x50] sm:$0xff]
    %v149 = vld [vmem:[#allocation5 + $0x58] sm:$0xff]
    %v150 = vld [vmem:[#allocation5 + $0x60] sm:$0xff]
    %v151 = vld [vmem:[#allocation5 + $0x68] sm:$0xff]
    %v152 = vld [vmem:[#allocation5 + $0x70] sm:$0xff]
    %v153 = vld [vmem:[#allocation5 + $0x78] sm:$0xff]
    %v154 = vld [vmem:[#allocation4] sm:$0x1]
    %vm155 = vcmask 261120
    %v157 = vsel %vm155, %v94, 0
    %v160 = vsel %vm155, %v95, 0
    %v163 = vsel %vm155, %v96, 0
    %v166 = vsel %vm155, %v97, 0
    %v169 = vsel %vm155, %v98, 0
    %v172 = vsel %vm155, %v99, 0
    %v175 = vsel %vm155, %v100, 0
    %v178 = vsel %vm155, %v101, 0
    %v181 = vsel %vm155, %v102, 0
    %v184 = vsel %vm155, %v103, 0
    %v187 = vsel %vm155, %v104, 0
    %v190 = vsel %vm155, %v105, 0
    %v193 = vsel %vm155, %v106, 0
    %v196 = vsel %vm155, %v107, 0
    %v199 = vsel %vm155, %v108, 0
    %v202 = vsel %vm155, %v109, 0
    %204 = vmatprep.subr.mxu0 0.0
    %205 = vmatpush1.msra.mxu0 %v126
    %206 = vmatprep.subr.mxu0 0.0
    %207 = vmatpush1.msra.mxu0 %v127
    %208 = vmatprep.subr.mxu0 0.0
    %209 = vmatpush1.msra.mxu0 %v128
    %210 = vmatprep.subr.mxu0 0.0
    %211 = vmatpush1.msra.mxu0 %v129
    %212 = vmatprep.subr.mxu0 0.0
    %213 = vmatpush1.msra.mxu0 0.0
    %214 = vmatprep.subr.mxu0 0.0
    %215 = vmatpush1.msra.mxu0 0.0
    %216 = vmatprep.subr.mxu0 0.0
    %217 = vmatpush1.msra.mxu0 0.0
    %218 = vmatprep.subr.mxu0 0.0
    %219 = vmatpush1.msra.mxu0 0.0
    %220 = vmatprep.subr.mxu0 0.0
    %221 = vmatpush1.msra.mxu0 0.0
    %222 = vmatprep.subr.mxu0 0.0
    %223 = vmatpush1.msra.mxu0 0.0
    %224 = vmatprep.subr.mxu0 0.0
    %225 = vmatpush1.msra.mxu0 0.0
    %226 = vmatprep.subr.mxu0 0.0
    %227 = vmatpush1.msra.mxu0 0.0
    %228 = vmatprep.subr.mxu0 0.0
    %229 = vmatpush1.msra.mxu0 0.0
    %230 = vmatprep.subr.mxu0 0.0
    %231 = vmatpush1.msra.mxu0 0.0
    %232 = vmatprep.subr.mxu0 0.0
    %233 = vmatpush1.msra.mxu0 0.0
    %234 = vmatprep.subr.mxu0 0.0
    %235 = vmatpush1.msra.mxu0 0.0
    %236 = vmatprep.subr.mxu0 0.0
    %237 = vmatpush1.msra.mxu0 0.0
    %238 = vmatprep.subr.mxu0 0.0
    %239 = vmatpush1.msra.mxu0 0.0
    %240 = vmatprep.subr.mxu0 0.0
    %241 = vmatpush1.msra.mxu0 0.0
    %242 = vmatprep.subr.mxu0 0.0
    %243 = vmatpush1.msra.mxu0 0.0
    %244 = vmatprep.subr.mxu0 0.0
    %245 = vmatpush1.msra.mxu0 0.0
    %246 = vmatprep.subr.mxu0 0.0
    %247 = vmatpush1.msra.mxu0 0.0
    %248 = vmatprep.subr.mxu0 0.0
    %249 = vmatpush1.msra.mxu0 0.0
    %250 = vmatprep.subr.mxu0 0.0
    %251 = vmatpush1.msra.mxu0 0.0
    %252 = vmatprep.subr.mxu0 0.0
    %253 = vmatpush1.msra.mxu0 0.0
    %254 = vmatprep.subr.mxu0 0.0
    %255 = vmatpush1.msra.mxu0 0.0
    %256 = vmatprep.subr.mxu0 0.0
    %257 = vmatpush1.msra.mxu0 0.0
    %258 = vmatprep.subr.mxu0 0.0
    %259 = vmatpush1.msra.mxu0 0.0
    %260 = vmatprep.subr.mxu0 0.0
    %261 = vmatpush1.msra.mxu0 0.0
    %262 = vmatprep.subr.mxu0 0.0
    %263 = vmatpush1.msra.mxu0 0.0
    %264 = vmatprep.subr.mxu0 0.0
    %265 = vmatpush1.msra.mxu0 0.0
    %266 = vmatprep.subr.mxu0 0.0
    %267 = vmatpush1.msra.mxu0 0.0
    %268 = vmatprep.mubr.f32.mxu0 0.0
    %269 = vmatmul.mubr.f32.gmra.mrb[0].mxu0 %v157
    %v270 = vpop.f32.mrb[0].mxu0
    %v271 = vadd.f32 0.0, %v270
    %v272 = vpop.f32.mrb[0].mxu0
    %273 = vmatprep.mubr.f32.mxu0 0.0
    %274 = vmatmul.mubr.f32.gmra.mrb[0].mxu0 %v160
    %v275 = vpop.f32.mrb[0].mxu0
    %v276 = vadd.f32 0.0, %v275
    %v277 = vpop.f32.mrb[0].mxu0
    %278 = vmatprep.mubr.f32.mxu0 0.0
    %279 = vmatmul.mubr.f32.gmra.mrb[0].mxu0 %v163
    %v280 = vpop.f32.mrb[0].mxu0
    %v281 = vadd.f32 0.0, %v280
    %v282 = vpop.f32.mrb[0].mxu0
    %283 = vmatprep.mubr.f32.mxu0 0.0
    %284 = vmatmul.mubr.f32.gmra.mrb[0].mxu0 %v166
    %v285 = vpop.f32.mrb[0].mxu0
    %v286 = vadd.f32 0.0, %v285
    %v287 = vpop.f32.mrb[0].mxu0
    %288 = vmatprep.mubr.f32.mxu0 0.0
    %289 = vmatmul.mubr.f32.gmra.mrb[0].mxu0 %v169
    %v290 = vpop.f32.mrb[0].mxu0
    %v291 = vadd.f32 0.0, %v290
    %v292 = vpop.f32.mrb[0].mxu0
    %293 = vmatprep.mubr.f32.mxu0 0.0
    %294 = vmatmul.mubr.f32.gmra.mrb[0].mxu0 %v172
    %v295 = vpop.f32.mrb[0].mxu0
    %v296 = vadd.f32 0.0, %v295
    %v297 = vpop.f32.mrb[0].mxu0
    %298 = vmatprep.mubr.f32.mxu0 0.0
    %299 = vmatmul.mubr.f32.gmra.mrb[0].mxu0 %v175
    %v300 = vpop.f32.mrb[0].mxu0
    %v301 = vadd.f32 0.0, %v300
    %v302 = vpop.f32.mrb[0].mxu0
    %303 = vmatprep.mubr.f32.mxu0 0.0
    %304 = vmatmul.mubr.f32.gmra.mrb[0].mxu0 %v178
    %v305 = vpop.f32.mrb[0].mxu0
    %v306 = vadd.f32 0.0, %v305
    %v307 = vpop.f32.mrb[0].mxu0
    %308 = vmatprep.mubr.f32.mxu0 0.0
    %309 = vmatmul.mubr.f32.gmra.mrb[0].mxu0 %v181
    %v310 = vpop.f32.mrb[0].mxu0
    %v311 = vadd.f32 0.0, %v310
    %v312 = vpop.f32.mrb[0].mxu0
    %313 = vmatprep.mubr.f32.mxu0 0.0
    %314 = vmatmul.mubr.f32.gmra.mrb[0].mxu0 %v184
    %v315 = vpop.f32.mrb[0].mxu0
    %v316 = vadd.f32 0.0, %v315
    %v317 = vpop.f32.mrb[0].mxu0
    %318 = vmatprep.mubr.f32.mxu0 0.0
    %319 = vmatmul.mubr.f32.gmra.mrb[0].mxu0 %v187
    %v320 = vpop.f32.mrb[0].mxu0
    %v321 = vadd.f32 0.0, %v320
    %v322 = vpop.f32.mrb[0].mxu0
    %323 = vmatprep.mubr.f32.mxu0 0.0
    %324 = vmatmul.mubr.f32.gmra.mrb[0].mxu0 %v190
    %v325 = vpop.f32.mrb[0].mxu0
    %v326 = vadd.f32 0.0, %v325
    %v327 = vpop.f32.mrb[0].mxu0
    %328 = vmatprep.mubr.f32.mxu0 0.0
    %329 = vmatmul.mubr.f32.gmra.mrb[0].mxu0 %v193
    %v330 = vpop.f32.mrb[0].mxu0
    %v331 = vadd.f32 0.0, %v330
    %v332 = vpop.f32.mrb[0].mxu0
    %333 = vmatprep.mubr.f32.mxu0 0.0
    %334 = vmatmul.mubr.f32.gmra.mrb[0].mxu0 %v196
    %v335 = vpop.f32.mrb[0].mxu0
    %v336 = vadd.f32 0.0, %v335
    %v337 = vpop.f32.mrb[0].mxu0
    %338 = vmatprep.mubr.f32.mxu0 0.0
    %339 = vmatmul.mubr.f32.gmra.mrb[0].mxu0 %v199
    %v340 = vpop.f32.mrb[0].mxu0
    %v341 = vadd.f32 0.0, %v340
    %v342 = vpop.f32.mrb[0].mxu0
    %343 = vmatprep.mubr.f32.mxu0 0.0
    %344 = vmatmul.mubr.f32.gmra.mrb[0].mxu0 %v202
    %v345 = vpop.f32.mrb[0].mxu0
    %v346 = vadd.f32 0.0, %v345
    %v347 = vpop.f32.mrb[0].mxu0
    %348 = vdwg.mxu0
    %v350 = vlaneseq
    %v351 = vshrl.u32 %v350, 7
    %v352 = vsub.s32 0, %v351
    %v353 = vrot.slane %v130, %v352
    %355 = vmatprep.subr.mxu0 0.0
    %356 = vmatpush1.msra.mxu0 %v271
    %357 = vmatprep.subr.mxu0 0.0
    %358 = vmatpush1.msra.mxu0 %v276
    %359 = vmatprep.subr.mxu0 0.0
    %360 = vmatpush1.msra.mxu0 %v281
    %361 = vmatprep.subr.mxu0 0.0
    %362 = vmatpush1.msra.mxu0 %v286
    %363 = vmatprep.subr.mxu0 0.0
    %364 = vmatpush1.msra.mxu0 %v291
    %365 = vmatprep.subr.mxu0 0.0
    %366 = vmatpush1.msra.mxu0 %v296
    %367 = vmatprep.subr.mxu0 0.0
    %368 = vmatpush1.msra.mxu0 %v301
    %369 = vmatprep.subr.mxu0 0.0
    %370 = vmatpush1.msra.mxu0 %v306
    %371 = vmatprep.subr.mxu0 0.0
    %372 = vmatpush1.msra.mxu0 %v311
    %373 = vmatprep.subr.mxu0 0.0
    %374 = vmatpush1.msra.mxu0 %v316
    %375 = vmatprep.subr.mxu0 0.0
    %376 = vmatpush1.msra.mxu0 %v321
    %377 = vmatprep.subr.mxu0 0.0
    %378 = vmatpush1.msra.mxu0 %v326
    %379 = vmatprep.subr.mxu0 0.0
    %380 = vmatpush1.msra.mxu0 %v331
    %381 = vmatprep.subr.mxu0 0.0
    %382 = vmatpush1.msra.mxu0 %v336
    %383 = vmatprep.subr.mxu0 0.0
    %384 = vmatpush1.msra.mxu0 %v341
    %385 = vmatprep.subr.mxu0 0.0
    %386 = vmatpush1.msra.mxu0 %v346
    %387 = vmatprep.subr.mxu0 0.0
    %388 = vmatpush1.msra.mxu0 0.0
    %389 = vmatprep.subr.mxu0 0.0
    %390 = vmatpush1.msra.mxu0 0.0
    %391 = vmatprep.subr.mxu0 0.0
    %392 = vmatpush1.msra.mxu0 0.0
    %393 = vmatprep.subr.mxu0 0.0
    %394 = vmatpush1.msra.mxu0 0.0
    %395 = vmatprep.subr.mxu0 0.0
    %396 = vmatpush1.msra.mxu0 0.0
    %397 = vmatprep.subr.mxu0 0.0
    %398 = vmatpush1.msra.mxu0 0.0
    %399 = vmatprep.subr.mxu0 0.0
    %400 = vmatpush1.msra.mxu0 0.0
    %401 = vmatprep.subr.mxu0 0.0
    %402 = vmatpush1.msra.mxu0 0.0
    %403 = vmatprep.subr.mxu0 0.0
    %404 = vmatpush1.msra.mxu0 0.0
    %405 = vmatprep.subr.mxu0 0.0
    %406 = vmatpush1.msra.mxu0 0.0
    %407 = vmatprep.subr.mxu0 0.0
    %408 = vmatpush1.msra.mxu0 0.0
    %409 = vmatprep.subr.mxu0 0.0
    %410 = vmatpush1.msra.mxu0 0.0
    %411 = vmatprep.subr.mxu0 0.0
    %412 = vmatpush1.msra.mxu0 0.0
    %413 = vmatprep.subr.mxu0 0.0
    %414 = vmatpush1.msra.mxu0 0.0
    %415 = vmatprep.subr.mxu0 0.0
    %416 = vmatpush1.msra.mxu0 0.0
    %417 = vmatprep.subr.mxu0 0.0
    %418 = vmatpush1.msra.mxu0 0.0
    %419 = vmatprep.mubr.f32.mxu0 0.0
    %420 = vmatmul.mubr.f32.gmra.mrb[0].mxu0 %v62
    %v421 = vpop.f32.mrb[0].mxu0
    %v422 = vadd.f32 %v353, %v421
    %v423 = vpop.f32.mrb[0].mxu0
    %424 = vmatprep.mubr.f32.mxu0 0.0
    %425 = vmatmul.mubr.f32.gmra.mrb[0].mxu0 %v63
    %v426 = vpop.f32.mrb[0].mxu0
    %v427 = vadd.f32 %v353, %v426
    %v428 = vpop.f32.mrb[0].mxu0
    %429 = vmatprep.mubr.f32.mxu0 0.0
    %430 = vmatmul.mubr.f32.gmra.mrb[0].mxu0 %v64
    %v431 = vpop.f32.mrb[0].mxu0
    %v432 = vadd.f32 %v353, %v431
    %v433 = vpop.f32.mrb[0].mxu0
    %434 = vmatprep.mubr.f32.mxu0 0.0
    %435 = vmatmul.mubr.f32.gmra.mrb[0].mxu0 %v65
    %v436 = vpop.f32.mrb[0].mxu0
    %v437 = vadd.f32 %v353, %v436
    %v438 = vpop.f32.mrb[0].mxu0
    %439 = vmatprep.mubr.f32.mxu0 0.0
    %440 = vmatmul.mubr.f32.gmra.mrb[0].mxu0 %v66
    %v441 = vpop.f32.mrb[0].mxu0
    %v442 = vadd.f32 %v353, %v441
    %v443 = vpop.f32.mrb[0].mxu0
    %444 = vmatprep.mubr.f32.mxu0 0.0
    %445 = vmatmul.mubr.f32.gmra.mrb[0].mxu0 %v67
    %v446 = vpop.f32.mrb[0].mxu0
    %v447 = vadd.f32 %v353, %v446
    %v448 = vpop.f32.mrb[0].mxu0
    %449 = vmatprep.mubr.f32.mxu0 0.0
    %450 = vmatmul.mubr.f32.gmra.mrb[0].mxu0 %v68
    %v451 = vpop.f32.mrb[0].mxu0
    %v452 = vadd.f32 %v353, %v451
    %v453 = vpop.f32.mrb[0].mxu0
    %454 = vmatprep.mubr.f32.mxu0 0.0
    %455 = vmatmul.mubr.f32.gmra.mrb[0].mxu0 %v69
    %v456 = vpop.f32.mrb[0].mxu0
    %v457 = vadd.f32 %v353, %v456
    %v458 = vpop.f32.mrb[0].mxu0
    %459 = vmatprep.mubr.f32.mxu0 0.0
    %460 = vmatmul.mubr.f32.gmra.mrb[0].mxu0 %v70
    %v461 = vpop.f32.mrb[0].mxu0
    %v462 = vadd.f32 %v353, %v461
    %v463 = vpop.f32.mrb[0].mxu0
    %464 = vmatprep.mubr.f32.mxu0 0.0
    %465 = vmatmul.mubr.f32.gmra.mrb[0].mxu0 %v71
    %v466 = vpop.f32.mrb[0].mxu0
    %v467 = vadd.f32 %v353, %v466
    %v468 = vpop.f32.mrb[0].mxu0
    %469 = vmatprep.mubr.f32.mxu0 0.0
    %470 = vmatmul.mubr.f32.gmra.mrb[0].mxu0 %v72
    %v471 = vpop.f32.mrb[0].mxu0
    %v472 = vadd.f32 %v353, %v471
    %v473 = vpop.f32.mrb[0].mxu0
    %474 = vmatprep.mubr.f32.mxu0 0.0
    %475 = vmatmul.mubr.f32.gmra.mrb[0].mxu0 %v73
    %v476 = vpop.f32.mrb[0].mxu0
    %v477 = vadd.f32 %v353, %v476
    %v478 = vpop.f32.mrb[0].mxu0
    %479 = vmatprep.mubr.f32.mxu0 0.0
    %480 = vmatmul.mubr.f32.gmra.mrb[0].mxu0 %v74
    %v481 = vpop.f32.mrb[0].mxu0
    %v482 = vadd.f32 %v353, %v481
    %v483 = vpop.f32.mrb[0].mxu0
    %484 = vmatprep.mubr.f32.mxu0 0.0
    %485 = vmatmul.mubr.f32.gmra.mrb[0].mxu0 %v75
    %v486 = vpop.f32.mrb[0].mxu0
    %v487 = vadd.f32 %v353, %v486
    %v488 = vpop.f32.mrb[0].mxu0
    %489 = vmatprep.mubr.f32.mxu0 0.0
    %490 = vmatmul.mubr.f32.gmra.mrb[0].mxu0 %v76
    %v491 = vpop.f32.mrb[0].mxu0
    %v492 = vadd.f32 %v353, %v491
    %v493 = vpop.f32.mrb[0].mxu0
    %494 = vmatprep.mubr.f32.mxu0 0.0
    %495 = vmatmul.mubr.f32.gmra.mrb[0].mxu0 %v77
    %v496 = vpop.f32.mrb[0].mxu0
    %v497 = vadd.f32 %v353, %v496
    %v498 = vpop.f32.mrb[0].mxu0
    %499 = vdwg.mxu0
    %vm500 = vcmp.gt.f32.partialorder %v422, 0.0
    %vm501 = vcmp.gt.f32.partialorder %v427, 0.0
    %vm502 = vcmp.gt.f32.partialorder %v432, 0.0
    %vm503 = vcmp.gt.f32.partialorder %v437, 0.0
    %vm504 = vcmp.gt.f32.partialorder %v442, 0.0
    %vm505 = vcmp.gt.f32.partialorder %v447, 0.0
    %vm506 = vcmp.gt.f32.partialorder %v452, 0.0
    %vm507 = vcmp.gt.f32.partialorder %v457, 0.0
    %vm508 = vcmp.gt.f32.partialorder %v462, 0.0
    %vm509 = vcmp.gt.f32.partialorder %v467, 0.0
    %vm510 = vcmp.gt.f32.partialorder %v472, 0.0
    %vm511 = vcmp.gt.f32.partialorder %v477, 0.0
    %vm512 = vcmp.gt.f32.partialorder %v482, 0.0
    %vm513 = vcmp.gt.f32.partialorder %v487, 0.0
    %vm514 = vcmp.gt.f32.partialorder %v492, 0.0
    %vm515 = vcmp.gt.f32.partialorder %v497, 0.0
    %v517 = vlaneseq
    %v518 = vshrl.u32 %v517, 7
    %v519 = vsub.s32 0, %v518
    %v520 = vrot.slane %v131, %v519
    %521 = vset.pattern.permute.xlu0 0
    %522 = vperm.xlu0 %521, %v520
    %v523 = vpop.permute.xlu0 %522
    %v525 = vmul.f32 %v523, %v422
    %v526 = vmul.f32 %v523, %v427
    %v527 = vmul.f32 %v523, %v432
    %v528 = vmul.f32 %v523, %v437
    %v529 = vmul.f32 %v523, %v442
    %v530 = vmul.f32 %v523, %v447
    %v531 = vmul.f32 %v523, %v452
    %v532 = vmul.f32 %v523, %v457
    %v533 = vmul.f32 %v523, %v462
    %v534 = vmul.f32 %v523, %v467
    %v535 = vmul.f32 %v523, %v472
    %v536 = vmul.f32 %v523, %v477
    %v537 = vmul.f32 %v523, %v482
    %v538 = vmul.f32 %v523, %v487
    %v539 = vmul.f32 %v523, %v492
    %v540 = vmul.f32 %v523, %v497
    %v541 = vsel %vm500, %v422, %v525
    %v542 = vsel %vm501, %v427, %v526
    %v543 = vsel %vm502, %v432, %v527
    %v544 = vsel %vm503, %v437, %v528
    %v545 = vsel %vm504, %v442, %v529
    %v546 = vsel %vm505, %v447, %v530
    %v547 = vsel %vm506, %v452, %v531
    %v548 = vsel %vm507, %v457, %v532
    %v549 = vsel %vm508, %v462, %v533
    %v550 = vsel %vm509, %v467, %v534
    %v551 = vsel %vm510, %v472, %v535
    %v552 = vsel %vm511, %v477, %v536
    %v553 = vsel %vm512, %v482, %v537
    %v554 = vsel %vm513, %v487, %v538
    %v555 = vsel %vm514, %v492, %v539
    %v556 = vsel %vm515, %v497, %v540
    %557 = vmatprep.subr.mxu0 0.0
    %558 = vmatpush1.msra.mxu0 %v132
    %559 = vmatprep.subr.mxu0 0.0
    %560 = vmatpush1.msra.mxu0 %v133
    %561 = vmatprep.subr.mxu0 0.0
    %562 = vmatpush1.msra.mxu0 %v134
    %563 = vmatprep.subr.mxu0 0.0
    %564 = vmatpush1.msra.mxu0 %v135
    %565 = vmatprep.subr.mxu0 0.0
    %566 = vmatpush1.msra.mxu0 0.0
    %567 = vmatprep.subr.mxu0 0.0
    %568 = vmatpush1.msra.mxu0 0.0
    %569 = vmatprep.subr.mxu0 0.0
    %570 = vmatpush1.msra.mxu0 0.0
    %571 = vmatprep.subr.mxu0 0.0
    %572 = vmatpush1.msra.mxu0 0.0
    %573 = vmatprep.subr.mxu0 0.0
    %574 = vmatpush1.msra.mxu0 0.0
    %575 = vmatprep.subr.mxu0 0.0
    %576 = vmatpush1.msra.mxu0 0.0
    %577 = vmatprep.subr.mxu0 0.0
    %578 = vmatpush1.msra.mxu0 0.0
    %579 = vmatprep.subr.mxu0 0.0
    %580 = vmatpush1.msra.mxu0 0.0
    %581 = vmatprep.subr.mxu0 0.0
    %582 = vmatpush1.msra.mxu0 0.0
    %583 = vmatprep.subr.mxu0 0.0
    %584 = vmatpush1.msra.mxu0 0.0
    %585 = vmatprep.subr.mxu0 0.0
    %586 = vmatpush1.msra.mxu0 0.0
    %587 = vmatprep.subr.mxu0 0.0
    %588 = vmatpush1.msra.mxu0 0.0
    %589 = vmatprep.subr.mxu0 0.0
    %590 = vmatpush1.msra.mxu0 0.0
    %591 = vmatprep.subr.mxu0 0.0
    %592 = vmatpush1.msra.mxu0 0.0
    %593 = vmatprep.subr.mxu0 0.0
    %594 = vmatpush1.msra.mxu0 0.0
    %595 = vmatprep.subr.mxu0 0.0
    %596 = vmatpush1.msra.mxu0 0.0
    %597 = vmatprep.subr.mxu0 0.0
    %598 = vmatpush1.msra.mxu0 0.0
    %599 = vmatprep.subr.mxu0 0.0
    %600 = vmatpush1.msra.mxu0 0.0
    %601 = vmatprep.subr.mxu0 0.0
    %602 = vmatpush1.msra.mxu0 0.0
    %603 = vmatprep.subr.mxu0 0.0
    %604 = vmatpush1.msra.mxu0 0.0
    %605 = vmatprep.subr.mxu0 0.0
    %606 = vmatpush1.msra.mxu0 0.0
    %607 = vmatprep.subr.mxu0 0.0
    %608 = vmatpush1.msra.mxu0 0.0
    %609 = vmatprep.subr.mxu0 0.0
    %610 = vmatpush1.msra.mxu0 0.0
    %611 = vmatprep.subr.mxu0 0.0
    %612 = vmatpush1.msra.mxu0 0.0
    %613 = vmatprep.subr.mxu0 0.0
    %614 = vmatpush1.msra.mxu0 0.0
    %615 = vmatprep.subr.mxu0 0.0
    %616 = vmatpush1.msra.mxu0 0.0
    %617 = vmatprep.subr.mxu0 0.0
    %618 = vmatpush1.msra.mxu0 0.0
    %619 = vmatprep.subr.mxu0 0.0
    %620 = vmatpush1.msra.mxu0 0.0
    %621 = vmatprep.mubr.f32.mxu0 0.0
    %622 = vmatmul.mubr.f32.gmra.mrb[0].mxu0 %v157
    %v623 = vpop.f32.mrb[0].mxu0
    %v624 = vadd.f32 0.0, %v623
    %v625 = vpop.f32.mrb[0].mxu0
    %626 = vmatprep.mubr.f32.mxu0 0.0
    %627 = vmatmul.mubr.f32.gmra.mrb[0].mxu0 %v160
    %v628 = vpop.f32.mrb[0].mxu0
    %v629 = vadd.f32 0.0, %v628
    %v630 = vpop.f32.mrb[0].mxu0
    %631 = vmatprep.mubr.f32.mxu0 0.0
    %632 = vmatmul.mubr.f32.gmra.mrb[0].mxu0 %v163
    %v633 = vpop.f32.mrb[0].mxu0
    %v634 = vadd.f32 0.0, %v633
    %v635 = vpop.f32.mrb[0].mxu0
    %636 = vmatprep.mubr.f32.mxu0 0.0
    %637 = vmatmul.mubr.f32.gmra.mrb[0].mxu0 %v166
    %v638 = vpop.f32.mrb[0].mxu0
    %v639 = vadd.f32 0.0, %v638
    %v640 = vpop.f32.mrb[0].mxu0
    %641 = vmatprep.mubr.f32.mxu0 0.0
    %642 = vmatmul.mubr.f32.gmra.mrb[0].mxu0 %v169
    %v643 = vpop.f32.mrb[0].mxu0
    %v644 = vadd.f32 0.0, %v643
    %v645 = vpop.f32.mrb[0].mxu0
    %646 = vmatprep.mubr.f32.mxu0 0.0
    %647 = vmatmul.mubr.f32.gmra.mrb[0].mxu0 %v172
    %v648 = vpop.f32.mrb[0].mxu0
    %v649 = vadd.f32 0.0, %v648
    %v650 = vpop.f32.mrb[0].mxu0
    %651 = vmatprep.mubr.f32.mxu0 0.0
    %652 = vmatmul.mubr.f32.gmra.mrb[0].mxu0 %v175
    %v653 = vpop.f32.mrb[0].mxu0
    %v654 = vadd.f32 0.0, %v653
    %v655 = vpop.f32.mrb[0].mxu0
    %656 = vmatprep.mubr.f32.mxu0 0.0
    %657 = vmatmul.mubr.f32.gmra.mrb[0].mxu0 %v178
    %v658 = vpop.f32.mrb[0].mxu0
    %v659 = vadd.f32 0.0, %v658
    %v660 = vpop.f32.mrb[0].mxu0
    %661 = vmatprep.mubr.f32.mxu0 0.0
    %662 = vmatmul.mubr.f32.gmra.mrb[0].mxu0 %v181
    %v663 = vpop.f32.mrb[0].mxu0
    %v664 = vadd.f32 0.0, %v663
    %v665 = vpop.f32.mrb[0].mxu0
    %666 = vmatprep.mubr.f32.mxu0 0.0
    %667 = vmatmul.mubr.f32.gmra.mrb[0].mxu0 %v184
    %v668 = vpop.f32.mrb[0].mxu0
    %v669 = vadd.f32 0.0, %v668
    %v670 = vpop.f32.mrb[0].mxu0
    %671 = vmatprep.mubr.f32.mxu0 0.0
    %672 = vmatmul.mubr.f32.gmra.mrb[0].mxu0 %v187
    %v673 = vpop.f32.mrb[0].mxu0
    %v674 = vadd.f32 0.0, %v673
    %v675 = vpop.f32.mrb[0].mxu0
    %676 = vmatprep.mubr.f32.mxu0 0.0
    %677 = vmatmul.mubr.f32.gmra.mrb[0].mxu0 %v190
    %v678 = vpop.f32.mrb[0].mxu0
    %v679 = vadd.f32 0.0, %v678
    %v680 = vpop.f32.mrb[0].mxu0
    %681 = vmatprep.mubr.f32.mxu0 0.0
    %682 = vmatmul.mubr.f32.gmra.mrb[0].mxu0 %v193
    %v683 = vpop.f32.mrb[0].mxu0
    %v684 = vadd.f32 0.0, %v683
    %v685 = vpop.f32.mrb[0].mxu0
    %686 = vmatprep.mubr.f32.mxu0 0.0
    %687 = vmatmul.mubr.f32.gmra.mrb[0].mxu0 %v196
    %v688 = vpop.f32.mrb[0].mxu0
    %v689 = vadd.f32 0.0, %v688
    %v690 = vpop.f32.mrb[0].mxu0
    %691 = vmatprep.mubr.f32.mxu0 0.0
    %692 = vmatmul.mubr.f32.gmra.mrb[0].mxu0 %v199
    %v693 = vpop.f32.mrb[0].mxu0
    %v694 = vadd.f32 0.0, %v693
    %v695 = vpop.f32.mrb[0].mxu0
    %696 = vmatprep.mubr.f32.mxu0 0.0
    %697 = vmatmul.mubr.f32.gmra.mrb[0].mxu0 %v202
    %v698 = vpop.f32.mrb[0].mxu0
    %v699 = vadd.f32 0.0, %v698
    %v700 = vpop.f32.mrb[0].mxu0
    %701 = vdwg.mxu0
    %v703 = vlaneseq
    %v704 = vshrl.u32 %v703, 7
    %v705 = vsub.s32 0, %v704
    %v706 = vrot.slane %v136, %v705
    %708 = vmatprep.subr.mxu0 0.0
    %709 = vmatpush1.msra.mxu0 %v624
    %710 = vmatprep.subr.mxu0 0.0
    %711 = vmatpush1.msra.mxu0 %v629
    %712 = vmatprep.subr.mxu0 0.0
    %713 = vmatpush1.msra.mxu0 %v634
    %714 = vmatprep.subr.mxu0 0.0
    %715 = vmatpush1.msra.mxu0 %v639
    %716 = vmatprep.subr.mxu0 0.0
    %717 = vmatpush1.msra.mxu0 %v644
    %718 = vmatprep.subr.mxu0 0.0
    %719 = vmatpush1.msra.mxu0 %v649
    %720 = vmatprep.subr.mxu0 0.0
    %721 = vmatpush1.msra.mxu0 %v654
    %722 = vmatprep.subr.mxu0 0.0
    %723 = vmatpush1.msra.mxu0 %v659
    %724 = vmatprep.subr.mxu0 0.0
    %725 = vmatpush1.msra.mxu0 %v664
    %726 = vmatprep.subr.mxu0 0.0
    %727 = vmatpush1.msra.mxu0 %v669
    %728 = vmatprep.subr.mxu0 0.0
    %729 = vmatpush1.msra.mxu0 %v674
    %730 = vmatprep.subr.mxu0 0.0
    %731 = vmatpush1.msra.mxu0 %v679
    %732 = vmatprep.subr.mxu0 0.0
    %733 = vmatpush1.msra.mxu0 %v684
    %734 = vmatprep.subr.mxu0 0.0
    %735 = vmatpush1.msra.mxu0 %v689
    %736 = vmatprep.subr.mxu0 0.0
    %737 = vmatpush1.msra.mxu0 %v694
    %738 = vmatprep.subr.mxu0 0.0
    %739 = vmatpush1.msra.mxu0 %v699
    %740 = vmatprep.subr.mxu0 0.0
    %741 = vmatpush1.msra.mxu0 0.0
    %742 = vmatprep.subr.mxu0 0.0
    %743 = vmatpush1.msra.mxu0 0.0
    %744 = vmatprep.subr.mxu0 0.0
    %745 = vmatpush1.msra.mxu0 0.0
    %746 = vmatprep.subr.mxu0 0.0
    %747 = vmatpush1.msra.mxu0 0.0
    %748 = vmatprep.subr.mxu0 0.0
    %749 = vmatpush1.msra.mxu0 0.0
    %750 = vmatprep.subr.mxu0 0.0
    %751 = vmatpush1.msra.mxu0 0.0
    %752 = vmatprep.subr.mxu0 0.0
    %753 = vmatpush1.msra.mxu0 0.0
    %754 = vmatprep.subr.mxu0 0.0
    %755 = vmatpush1.msra.mxu0 0.0
    %756 = vmatprep.subr.mxu0 0.0
    %757 = vmatpush1.msra.mxu0 0.0
    %758 = vmatprep.subr.mxu0 0.0
    %759 = vmatpush1.msra.mxu0 0.0
    %760 = vmatprep.subr.mxu0 0.0
    %761 = vmatpush1.msra.mxu0 0.0
    %762 = vmatprep.subr.mxu0 0.0
    %763 = vmatpush1.msra.mxu0 0.0
    %764 = vmatprep.subr.mxu0 0.0
    %765 = vmatpush1.msra.mxu0 0.0
    %766 = vmatprep.subr.mxu0 0.0
    %767 = vmatpush1.msra.mxu0 0.0
    %768 = vmatprep.subr.mxu0 0.0
    %769 = vmatpush1.msra.mxu0 0.0
    %770 = vmatprep.subr.mxu0 0.0
    %771 = vmatpush1.msra.mxu0 0.0
    %772 = vmatprep.mubr.f32.mxu0 0.0
    %773 = vmatmul.mubr.f32.gmra.mrb[0].mxu0 %v78
    %v774 = vpop.f32.mrb[0].mxu0
    %v775 = vadd.f32 %v706, %v774
    %v776 = vpop.f32.mrb[0].mxu0
    %777 = vmatprep.mubr.f32.mxu0 0.0
    %778 = vmatmul.mubr.f32.gmra.mrb[0].mxu0 %v79
    %v779 = vpop.f32.mrb[0].mxu0
    %v780 = vadd.f32 %v706, %v779
    %v781 = vpop.f32.mrb[0].mxu0
    %782 = vmatprep.mubr.f32.mxu0 0.0
    %783 = vmatmul.mubr.f32.gmra.mrb[0].mxu0 %v80
    %v784 = vpop.f32.mrb[0].mxu0
    %v785 = vadd.f32 %v706, %v784
    %v786 = vpop.f32.mrb[0].mxu0
    %787 = vmatprep.mubr.f32.mxu0 0.0
    %788 = vmatmul.mubr.f32.gmra.mrb[0].mxu0 %v81
    %v789 = vpop.f32.mrb[0].mxu0
    %v790 = vadd.f32 %v706, %v789
    %v791 = vpop.f32.mrb[0].mxu0
    %792 = vmatprep.mubr.f32.mxu0 0.0
    %793 = vmatmul.mubr.f32.gmra.mrb[0].mxu0 %v82
    %v794 = vpop.f32.mrb[0].mxu0
    %v795 = vadd.f32 %v706, %v794
    %v796 = vpop.f32.mrb[0].mxu0
    %797 = vmatprep.mubr.f32.mxu0 0.0
    %798 = vmatmul.mubr.f32.gmra.mrb[0].mxu0 %v83
    %v799 = vpop.f32.mrb[0].mxu0
    %v800 = vadd.f32 %v706, %v799
    %v801 = vpop.f32.mrb[0].mxu0
    %802 = vmatprep.mubr.f32.mxu0 0.0
    %803 = vmatmul.mubr.f32.gmra.mrb[0].mxu0 %v84
    %v804 = vpop.f32.mrb[0].mxu0
    %v805 = vadd.f32 %v706, %v804
    %v806 = vpop.f32.mrb[0].mxu0
    %807 = vmatprep.mubr.f32.mxu0 0.0
    %808 = vmatmul.mubr.f32.gmra.mrb[0].mxu0 %v85
    %v809 = vpop.f32.mrb[0].mxu0
    %v810 = vadd.f32 %v706, %v809
    %v811 = vpop.f32.mrb[0].mxu0
    %812 = vmatprep.mubr.f32.mxu0 0.0
    %813 = vmatmul.mubr.f32.gmra.mrb[0].mxu0 %v86
    %v814 = vpop.f32.mrb[0].mxu0
    %v815 = vadd.f32 %v706, %v814
    %v816 = vpop.f32.mrb[0].mxu0
    %817 = vmatprep.mubr.f32.mxu0 0.0
    %818 = vmatmul.mubr.f32.gmra.mrb[0].mxu0 %v87
    %v819 = vpop.f32.mrb[0].mxu0
    %v820 = vadd.f32 %v706, %v819
    %v821 = vpop.f32.mrb[0].mxu0
    %822 = vmatprep.mubr.f32.mxu0 0.0
    %823 = vmatmul.mubr.f32.gmra.mrb[0].mxu0 %v88
    %v824 = vpop.f32.mrb[0].mxu0
    %v825 = vadd.f32 %v706, %v824
    %v826 = vpop.f32.mrb[0].mxu0
    %827 = vmatprep.mubr.f32.mxu0 0.0
    %828 = vmatmul.mubr.f32.gmra.mrb[0].mxu0 %v89
    %v829 = vpop.f32.mrb[0].mxu0
    %v830 = vadd.f32 %v706, %v829
    %v831 = vpop.f32.mrb[0].mxu0
    %832 = vmatprep.mubr.f32.mxu0 0.0
    %833 = vmatmul.mubr.f32.gmra.mrb[0].mxu0 %v90
    %v834 = vpop.f32.mrb[0].mxu0
    %v835 = vadd.f32 %v706, %v834
    %v836 = vpop.f32.mrb[0].mxu0
    %837 = vmatprep.mubr.f32.mxu0 0.0
    %838 = vmatmul.mubr.f32.gmra.mrb[0].mxu0 %v91
    %v839 = vpop.f32.mrb[0].mxu0
    %v840 = vadd.f32 %v706, %v839
    %v841 = vpop.f32.mrb[0].mxu0
    %842 = vmatprep.mubr.f32.mxu0 0.0
    %843 = vmatmul.mubr.f32.gmra.mrb[0].mxu0 %v92
    %v844 = vpop.f32.mrb[0].mxu0
    %v845 = vadd.f32 %v706, %v844
    %v846 = vpop.f32.mrb[0].mxu0
    %847 = vmatprep.mubr.f32.mxu0 0.0
    %848 = vmatmul.mubr.f32.gmra.mrb[0].mxu0 %v93
    %v849 = vpop.f32.mrb[0].mxu0
    %v850 = vadd.f32 %v706, %v849
    %v851 = vpop.f32.mrb[0].mxu0
    %852 = vdwg.mxu0
    %vm853 = vcmp.gt.f32.partialorder %v775, 0.0
    %vm854 = vcmp.gt.f32.partialorder %v780, 0.0
    %vm855 = vcmp.gt.f32.partialorder %v785, 0.0
    %vm856 = vcmp.gt.f32.partialorder %v790, 0.0
    %vm857 = vcmp.gt.f32.partialorder %v795, 0.0
    %vm858 = vcmp.gt.f32.partialorder %v800, 0.0
    %vm859 = vcmp.gt.f32.partialorder %v805, 0.0
    %vm860 = vcmp.gt.f32.partialorder %v810, 0.0
    %vm861 = vcmp.gt.f32.partialorder %v815, 0.0
    %vm862 = vcmp.gt.f32.partialorder %v820, 0.0
    %vm863 = vcmp.gt.f32.partialorder %v825, 0.0
    %vm864 = vcmp.gt.f32.partialorder %v830, 0.0
    %vm865 = vcmp.gt.f32.partialorder %v835, 0.0
    %vm866 = vcmp.gt.f32.partialorder %v840, 0.0
    %vm867 = vcmp.gt.f32.partialorder %v845, 0.0
    %vm868 = vcmp.gt.f32.partialorder %v850, 0.0
    %v870 = vlaneseq
    %v871 = vshrl.u32 %v870, 7
    %v872 = vsub.s32 0, %v871
    %v873 = vrot.slane %v137, %v872
    %874 = vset.pattern.permute.xlu0 0
    %875 = vperm.xlu0 %874, %v873
    %v876 = vpop.permute.xlu0 %875
    %v878 = vmul.f32 %v876, %v775
    %v879 = vmul.f32 %v876, %v780
    %v880 = vmul.f32 %v876, %v785
    %v881 = vmul.f32 %v876, %v790
    %v882 = vmul.f32 %v876, %v795
    %v883 = vmul.f32 %v876, %v800
    %v884 = vmul.f32 %v876, %v805
    %v885 = vmul.f32 %v876, %v810
    %v886 = vmul.f32 %v876, %v815
    %v887 = vmul.f32 %v876, %v820
    %v888 = vmul.f32 %v876, %v825
    %v889 = vmul.f32 %v876, %v830
    %v890 = vmul.f32 %v876, %v835
    %v891 = vmul.f32 %v876, %v840
    %v892 = vmul.f32 %v876, %v845
    %v893 = vmul.f32 %v876, %v850
    %v894 = vsel %vm853, %v775, %v878
    %v895 = vsel %vm854, %v780, %v879
    %v896 = vsel %vm855, %v785, %v880
    %v897 = vsel %vm856, %v790, %v881
    %v898 = vsel %vm857, %v795, %v882
    %v899 = vsel %vm858, %v800, %v883
    %v900 = vsel %vm859, %v805, %v884
    %v901 = vsel %vm860, %v810, %v885
    %v902 = vsel %vm861, %v815, %v886
    %v903 = vsel %vm862, %v820, %v887
    %v904 = vsel %vm863, %v825, %v888
    %v905 = vsel %vm864, %v830, %v889
    %v906 = vsel %vm865, %v835, %v890
    %v907 = vsel %vm866, %v840, %v891
    %v908 = vsel %vm867, %v845, %v892
    %v909 = vsel %vm868, %v850, %v893
    %v911 = vsel %vm155, %v110, 0
    %v914 = vsel %vm155, %v111, 0
    %v917 = vsel %vm155, %v112, 0
    %v920 = vsel %vm155, %v113, 0
    %v923 = vsel %vm155, %v114, 0
    %v926 = vsel %vm155, %v115, 0
    %v929 = vsel %vm155, %v116, 0
    %v932 = vsel %vm155, %v117, 0
    %v935 = vsel %vm155, %v118, 0
    %v938 = vsel %vm155, %v119, 0
    %v941 = vsel %vm155, %v120, 0
    %v944 = vsel %vm155, %v121, 0
    %v947 = vsel %vm155, %v122, 0
    %v950 = vsel %vm155, %v123, 0
    %v953 = vsel %vm155, %v124, 0
    %v956 = vsel %vm155, %v125, 0
    %958 = vmatprep.subr.mxu0 0.0
    %959 = vmatpush1.msra.mxu0 %v126
    %960 = vmatprep.subr.mxu0 0.0
    %961 = vmatpush1.msra.mxu0 %v127
    %962 = vmatprep.subr.mxu0 0.0
    %963 = vmatpush1.msra.mxu0 %v128
    %964 = vmatprep.subr.mxu0 0.0
    %965 = vmatpush1.msra.mxu0 %v129
    %966 = vmatprep.subr.mxu0 0.0
    %967 = vmatpush1.msra.mxu0 0.0
    %968 = vmatprep.subr.mxu0 0.0
    %969 = vmatpush1.msra.mxu0 0.0
    %970 = vmatprep.subr.mxu0 0.0
    %971 = vmatpush1.msra.mxu0 0.0
    %972 = vmatprep.subr.mxu0 0.0
    %973 = vmatpush1.msra.mxu0 0.0
    %974 = vmatprep.subr.mxu0 0.0
    %975 = vmatpush1.msra.mxu0 0.0
    %976 = vmatprep.subr.mxu0 0.0
    %977 = vmatpush1.msra.mxu0 0.0
    %978 = vmatprep.subr.mxu0 0.0
    %979 = vmatpush1.msra.mxu0 0.0
    %980 = vmatprep.subr.mxu0 0.0
    %981 = vmatpush1.msra.mxu0 0.0
    %982 = vmatprep.subr.mxu0 0.0
    %983 = vmatpush1.msra.mxu0 0.0
    %984 = vmatprep.subr.mxu0 0.0
    %985 = vmatpush1.msra.mxu0 0.0
    %986 = vmatprep.subr.mxu0 0.0
    %987 = vmatpush1.msra.mxu0 0.0
    %988 = vmatprep.subr.mxu0 0.0
    %989 = vmatpush1.msra.mxu0 0.0
    %990 = vmatprep.subr.mxu0 0.0
    %991 = vmatpush1.msra.mxu0 0.0
    %992 = vmatprep.subr.mxu0 0.0
    %993 = vmatpush1.msra.mxu0 0.0
    %994 = vmatprep.subr.mxu0 0.0
    %995 = vmatpush1.msra.mxu0 0.0
    %996 = vmatprep.subr.mxu0 0.0
    %997 = vmatpush1.msra.mxu0 0.0
    %998 = vmatprep.subr.mxu0 0.0
    %999 = vmatpush1.msra.mxu0 0.0
    %1000 = vmatprep.subr.mxu0 0.0
    %1001 = vmatpush1.msra.mxu0 0.0
    %1002 = vmatprep.subr.mxu0 0.0
    %1003 = vmatpush1.msra.mxu0 0.0
    %1004 = vmatprep.subr.mxu0 0.0
    %1005 = vmatpush1.msra.mxu0 0.0
    %1006 = vmatprep.subr.mxu0 0.0
    %1007 = vmatpush1.msra.mxu0 0.0
    %1008 = vmatprep.subr.mxu0 0.0
    %1009 = vmatpush1.msra.mxu0 0.0
    %1010 = vmatprep.subr.mxu0 0.0
    %1011 = vmatpush1.msra.mxu0 0.0
    %1012 = vmatprep.subr.mxu0 0.0
    %1013 = vmatpush1.msra.mxu0 0.0
    %1014 = vmatprep.subr.mxu0 0.0
    %1015 = vmatpush1.msra.mxu0 0.0
    %1016 = vmatprep.subr.mxu0 0.0
    %1017 = vmatpush1.msra.mxu0 0.0
    %1018 = vmatprep.subr.mxu0 0.0
    %1019 = vmatpush1.msra.mxu0 0.0
    %1020 = vmatprep.subr.mxu0 0.0
    %1021 = vmatpush1.msra.mxu0 0.0
    %1022 = vmatprep.mubr.f32.mxu0 0.0
    %1023 = vmatmul.mubr.f32.gmra.mrb[0].mxu0 %v911
    %v1024 = vpop.f32.mrb[0].mxu0
    %v1025 = vadd.f32 0.0, %v1024
    %v1026 = vpop.f32.mrb[0].mxu0
    %1027 = vmatprep.mubr.f32.mxu0 0.0
    %1028 = vmatmul.mubr.f32.gmra.mrb[0].mxu0 %v914
    %v1029 = vpop.f32.mrb[0].mxu0
    %v1030 = vadd.f32 0.0, %v1029
    %v1031 = vpop.f32.mrb[0].mxu0
    %1032 = vmatprep.mubr.f32.mxu0 0.0
    %1033 = vmatmul.mubr.f32.gmra.mrb[0].mxu0 %v917
    %v1034 = vpop.f32.mrb[0].mxu0
    %v1035 = vadd.f32 0.0, %v1034
    %v1036 = vpop.f32.mrb[0].mxu0
    %1037 = vmatprep.mubr.f32.mxu0 0.0
    %1038 = vmatmul.mubr.f32.gmra.mrb[0].mxu0 %v920
    %v1039 = vpop.f32.mrb[0].mxu0
    %v1040 = vadd.f32 0.0, %v1039
    %v1041 = vpop.f32.mrb[0].mxu0
    %1042 = vmatprep.mubr.f32.mxu0 0.0
    %1043 = vmatmul.mubr.f32.gmra.mrb[0].mxu0 %v923
    %v1044 = vpop.f32.mrb[0].mxu0
    %v1045 = vadd.f32 0.0, %v1044
    %v1046 = vpop.f32.mrb[0].mxu0
    %1047 = vmatprep.mubr.f32.mxu0 0.0
    %1048 = vmatmul.mubr.f32.gmra.mrb[0].mxu0 %v926
    %v1049 = vpop.f32.mrb[0].mxu0
    %v1050 = vadd.f32 0.0, %v1049
    %v1051 = vpop.f32.mrb[0].mxu0
    %1052 = vmatprep.mubr.f32.mxu0 0.0
    %1053 = vmatmul.mubr.f32.gmra.mrb[0].mxu0 %v929
    %v1054 = vpop.f32.mrb[0].mxu0
    %v1055 = vadd.f32 0.0, %v1054
    %v1056 = vpop.f32.mrb[0].mxu0
    %1057 = vmatprep.mubr.f32.mxu0 0.0
    %1058 = vmatmul.mubr.f32.gmra.mrb[0].mxu0 %v932
    %v1059 = vpop.f32.mrb[0].mxu0
    %v1060 = vadd.f32 0.0, %v1059
    %v1061 = vpop.f32.mrb[0].mxu0
    %1062 = vmatprep.mubr.f32.mxu0 0.0
    %1063 = vmatmul.mubr.f32.gmra.mrb[0].mxu0 %v935
    %v1064 = vpop.f32.mrb[0].mxu0
    %v1065 = vadd.f32 0.0, %v1064
    %v1066 = vpop.f32.mrb[0].mxu0
    %1067 = vmatprep.mubr.f32.mxu0 0.0
    %1068 = vmatmul.mubr.f32.gmra.mrb[0].mxu0 %v938
    %v1069 = vpop.f32.mrb[0].mxu0
    %v1070 = vadd.f32 0.0, %v1069
    %v1071 = vpop.f32.mrb[0].mxu0
    %1072 = vmatprep.mubr.f32.mxu0 0.0
    %1073 = vmatmul.mubr.f32.gmra.mrb[0].mxu0 %v941
    %v1074 = vpop.f32.mrb[0].mxu0
    %v1075 = vadd.f32 0.0, %v1074
    %v1076 = vpop.f32.mrb[0].mxu0
    %1077 = vmatprep.mubr.f32.mxu0 0.0
    %1078 = vmatmul.mubr.f32.gmra.mrb[0].mxu0 %v944
    %v1079 = vpop.f32.mrb[0].mxu0
    %v1080 = vadd.f32 0.0, %v1079
    %v1081 = vpop.f32.mrb[0].mxu0
    %1082 = vmatprep.mubr.f32.mxu0 0.0
    %1083 = vmatmul.mubr.f32.gmra.mrb[0].mxu0 %v947
    %v1084 = vpop.f32.mrb[0].mxu0
    %v1085 = vadd.f32 0.0, %v1084
    %v1086 = vpop.f32.mrb[0].mxu0
    %1087 = vmatprep.mubr.f32.mxu0 0.0
    %1088 = vmatmul.mubr.f32.gmra.mrb[0].mxu0 %v950
    %v1089 = vpop.f32.mrb[0].mxu0
    %v1090 = vadd.f32 0.0, %v1089
    %v1091 = vpop.f32.mrb[0].mxu0
    %1092 = vmatprep.mubr.f32.mxu0 0.0
    %1093 = vmatmul.mubr.f32.gmra.mrb[0].mxu0 %v953
    %v1094 = vpop.f32.mrb[0].mxu0
    %v1095 = vadd.f32 0.0, %v1094
    %v1096 = vpop.f32.mrb[0].mxu0
    %1097 = vmatprep.mubr.f32.mxu0 0.0
    %1098 = vmatmul.mubr.f32.gmra.mrb[0].mxu0 %v956
    %v1099 = vpop.f32.mrb[0].mxu0
    %v1100 = vadd.f32 0.0, %v1099
    %v1101 = vpop.f32.mrb[0].mxu0
    %1102 = vdwg.mxu0
    %1103 = vmatprep.subr.mxu0 0.0
    %1104 = vmatpush1.msra.mxu0 %v1025
    %1105 = vmatprep.subr.mxu0 0.0
    %1106 = vmatpush1.msra.mxu0 %v1030
    %1107 = vmatprep.subr.mxu0 0.0
    %1108 = vmatpush1.msra.mxu0 %v1035
    %1109 = vmatprep.subr.mxu0 0.0
    %1110 = vmatpush1.msra.mxu0 %v1040
    %1111 = vmatprep.subr.mxu0 0.0
    %1112 = vmatpush1.msra.mxu0 %v1045
    %1113 = vmatprep.subr.mxu0 0.0
    %1114 = vmatpush1.msra.mxu0 %v1050
    %1115 = vmatprep.subr.mxu0 0.0
    %1116 = vmatpush1.msra.mxu0 %v1055
    %1117 = vmatprep.subr.mxu0 0.0
    %1118 = vmatpush1.msra.mxu0 %v1060
    %1119 = vmatprep.subr.mxu0 0.0
    %1120 = vmatpush1.msra.mxu0 %v1065
    %1121 = vmatprep.subr.mxu0 0.0
    %1122 = vmatpush1.msra.mxu0 %v1070
    %1123 = vmatprep.subr.mxu0 0.0
    %1124 = vmatpush1.msra.mxu0 %v1075
    %1125 = vmatprep.subr.mxu0 0.0
    %1126 = vmatpush1.msra.mxu0 %v1080
    %1127 = vmatprep.subr.mxu0 0.0
    %1128 = vmatpush1.msra.mxu0 %v1085
    %1129 = vmatprep.subr.mxu0 0.0
    %1130 = vmatpush1.msra.mxu0 %v1090
    %1131 = vmatprep.subr.mxu0 0.0
    %1132 = vmatpush1.msra.mxu0 %v1095
    %1133 = vmatprep.subr.mxu0 0.0
    %1134 = vmatpush1.msra.mxu0 %v1100
    %1135 = vmatprep.subr.mxu0 0.0
    %1136 = vmatpush1.msra.mxu0 0.0
    %1137 = vmatprep.subr.mxu0 0.0
    %1138 = vmatpush1.msra.mxu0 0.0
    %1139 = vmatprep.subr.mxu0 0.0
    %1140 = vmatpush1.msra.mxu0 0.0
    %1141 = vmatprep.subr.mxu0 0.0
    %1142 = vmatpush1.msra.mxu0 0.0
    %1143 = vmatprep.subr.mxu0 0.0
    %1144 = vmatpush1.msra.mxu0 0.0
    %1145 = vmatprep.subr.mxu0 0.0
    %1146 = vmatpush1.msra.mxu0 0.0
    %1147 = vmatprep.subr.mxu0 0.0
    %1148 = vmatpush1.msra.mxu0 0.0
    %1149 = vmatprep.subr.mxu0 0.0
    %1150 = vmatpush1.msra.mxu0 0.0
    %1151 = vmatprep.subr.mxu0 0.0
    %1152 = vmatpush1.msra.mxu0 0.0
    %1153 = vmatprep.subr.mxu0 0.0
    %1154 = vmatpush1.msra.mxu0 0.0
    %1155 = vmatprep.subr.mxu0 0.0
    %1156 = vmatpush1.msra.mxu0 0.0
    %1157 = vmatprep.subr.mxu0 0.0
    %1158 = vmatpush1.msra.mxu0 0.0
    %1159 = vmatprep.subr.mxu0 0.0
    %1160 = vmatpush1.msra.mxu0 0.0
    %1161 = vmatprep.subr.mxu0 0.0
    %1162 = vmatpush1.msra.mxu0 0.0
    %1163 = vmatprep.subr.mxu0 0.0
    %1164 = vmatpush1.msra.mxu0 0.0
    %1165 = vmatprep.subr.mxu0 0.0
    %1166 = vmatpush1.msra.mxu0 0.0
    %1167 = vmatprep.mubr.f32.mxu0 0.0
    %1168 = vmatmul.mubr.f32.gmra.mrb[0].mxu0 %v62
    %v1169 = vpop.f32.mrb[0].mxu0
    %v1170 = vadd.f32 %v353, %v1169
    %v1171 = vpop.f32.mrb[0].mxu0
    %1172 = vmatprep.mubr.f32.mxu0 0.0
    %1173 = vmatmul.mubr.f32.gmra.mrb[0].mxu0 %v63
    %v1174 = vpop.f32.mrb[0].mxu0
    %v1175 = vadd.f32 %v353, %v1174
    %v1176 = vpop.f32.mrb[0].mxu0
    %1177 = vmatprep.mubr.f32.mxu0 0.0
    %1178 = vmatmul.mubr.f32.gmra.mrb[0].mxu0 %v64
    %v1179 = vpop.f32.mrb[0].mxu0
    %v1180 = vadd.f32 %v353, %v1179
    %v1181 = vpop.f32.mrb[0].mxu0
    %1182 = vmatprep.mubr.f32.mxu0 0.0
    %1183 = vmatmul.mubr.f32.gmra.mrb[0].mxu0 %v65
    %v1184 = vpop.f32.mrb[0].mxu0
    %v1185 = vadd.f32 %v353, %v1184
    %v1186 = vpop.f32.mrb[0].mxu0
    %1187 = vmatprep.mubr.f32.mxu0 0.0
    %1188 = vmatmul.mubr.f32.gmra.mrb[0].mxu0 %v66
    %v1189 = vpop.f32.mrb[0].mxu0
    %v1190 = vadd.f32 %v353, %v1189
    %v1191 = vpop.f32.mrb[0].mxu0
    %1192 = vmatprep.mubr.f32.mxu0 0.0
    %1193 = vmatmul.mubr.f32.gmra.mrb[0].mxu0 %v67
    %v1194 = vpop.f32.mrb[0].mxu0
    %v1195 = vadd.f32 %v353, %v1194
    %v1196 = vpop.f32.mrb[0].mxu0
    %1197 = vmatprep.mubr.f32.mxu0 0.0
    %1198 = vmatmul.mubr.f32.gmra.mrb[0].mxu0 %v68
    %v1199 = vpop.f32.mrb[0].mxu0
    %v1200 = vadd.f32 %v353, %v1199
    %v1201 = vpop.f32.mrb[0].mxu0
    %1202 = vmatprep.mubr.f32.mxu0 0.0
    %1203 = vmatmul.mubr.f32.gmra.mrb[0].mxu0 %v69
    %v1204 = vpop.f32.mrb[0].mxu0
    %v1205 = vadd.f32 %v353, %v1204
    %v1206 = vpop.f32.mrb[0].mxu0
    %1207 = vmatprep.mubr.f32.mxu0 0.0
    %1208 = vmatmul.mubr.f32.gmra.mrb[0].mxu0 %v70
    %v1209 = vpop.f32.mrb[0].mxu0
    %v1210 = vadd.f32 %v353, %v1209
    %v1211 = vpop.f32.mrb[0].mxu0
    %1212 = vmatprep.mubr.f32.mxu0 0.0
    %1213 = vmatmul.mubr.f32.gmra.mrb[0].mxu0 %v71
    %v1214 = vpop.f32.mrb[0].mxu0
    %v1215 = vadd.f32 %v353, %v1214
    %v1216 = vpop.f32.mrb[0].mxu0
    %1217 = vmatprep.mubr.f32.mxu0 0.0
    %1218 = vmatmul.mubr.f32.gmra.mrb[0].mxu0 %v72
    %v1219 = vpop.f32.mrb[0].mxu0
    %v1220 = vadd.f32 %v353, %v1219
    %v1221 = vpop.f32.mrb[0].mxu0
    %1222 = vmatprep.mubr.f32.mxu0 0.0
    %1223 = vmatmul.mubr.f32.gmra.mrb[0].mxu0 %v73
    %v1224 = vpop.f32.mrb[0].mxu0
    %v1225 = vadd.f32 %v353, %v1224
    %v1226 = vpop.f32.mrb[0].mxu0
    %1227 = vmatprep.mubr.f32.mxu0 0.0
    %1228 = vmatmul.mubr.f32.gmra.mrb[0].mxu0 %v74
    %v1229 = vpop.f32.mrb[0].mxu0
    %v1230 = vadd.f32 %v353, %v1229
    %v1231 = vpop.f32.mrb[0].mxu0
    %1232 = vmatprep.mubr.f32.mxu0 0.0
    %1233 = vmatmul.mubr.f32.gmra.mrb[0].mxu0 %v75
    %v1234 = vpop.f32.mrb[0].mxu0
    %v1235 = vadd.f32 %v353, %v1234
    %v1236 = vpop.f32.mrb[0].mxu0
    %1237 = vmatprep.mubr.f32.mxu0 0.0
    %1238 = vmatmul.mubr.f32.gmra.mrb[0].mxu0 %v76
    %v1239 = vpop.f32.mrb[0].mxu0
    %v1240 = vadd.f32 %v353, %v1239
    %v1241 = vpop.f32.mrb[0].mxu0
    %1242 = vmatprep.mubr.f32.mxu0 0.0
    %1243 = vmatmul.mubr.f32.gmra.mrb[0].mxu0 %v77
    %v1244 = vpop.f32.mrb[0].mxu0
    %v1245 = vadd.f32 %v353, %v1244
    %v1246 = vpop.f32.mrb[0].mxu0
    %1247 = vdwg.mxu0
    %vm1248 = vcmp.gt.f32.partialorder %v1170, 0.0
    %vm1249 = vcmp.gt.f32.partialorder %v1175, 0.0
    %vm1250 = vcmp.gt.f32.partialorder %v1180, 0.0
    %vm1251 = vcmp.gt.f32.partialorder %v1185, 0.0
    %vm1252 = vcmp.gt.f32.partialorder %v1190, 0.0
    %vm1253 = vcmp.gt.f32.partialorder %v1195, 0.0
    %vm1254 = vcmp.gt.f32.partialorder %v1200, 0.0
    %vm1255 = vcmp.gt.f32.partialorder %v1205, 0.0
    %vm1256 = vcmp.gt.f32.partialorder %v1210, 0.0
    %vm1257 = vcmp.gt.f32.partialorder %v1215, 0.0
    %vm1258 = vcmp.gt.f32.partialorder %v1220, 0.0
    %vm1259 = vcmp.gt.f32.partialorder %v1225, 0.0
    %vm1260 = vcmp.gt.f32.partialorder %v1230, 0.0
    %vm1261 = vcmp.gt.f32.partialorder %v1235, 0.0
    %vm1262 = vcmp.gt.f32.partialorder %v1240, 0.0
    %vm1263 = vcmp.gt.f32.partialorder %v1245, 0.0
    %v1264 = vmul.f32 %v523, %v1170
    %v1265 = vmul.f32 %v523, %v1175
    %v1266 = vmul.f32 %v523, %v1180
    %v1267 = vmul.f32 %v523, %v1185
    %v1268 = vmul.f32 %v523, %v1190
    %v1269 = vmul.f32 %v523, %v1195
    %v1270 = vmul.f32 %v523, %v1200
    %v1271 = vmul.f32 %v523, %v1205
    %v1272 = vmul.f32 %v523, %v1210
    %v1273 = vmul.f32 %v523, %v1215
    %v1274 = vmul.f32 %v523, %v1220
    %v1275 = vmul.f32 %v523, %v1225
    %v1276 = vmul.f32 %v523, %v1230
    %v1277 = vmul.f32 %v523, %v1235
    %v1278 = vmul.f32 %v523, %v1240
    %v1279 = vmul.f32 %v523, %v1245
    %v1280 = vsel %vm1248, %v1170, %v1264
    %v1281 = vsel %vm1249, %v1175, %v1265
    %v1282 = vsel %vm1250, %v1180, %v1266
    %v1283 = vsel %vm1251, %v1185, %v1267
    %v1284 = vsel %vm1252, %v1190, %v1268
    %v1285 = vsel %vm1253, %v1195, %v1269
    %v1286 = vsel %vm1254, %v1200, %v1270
    %v1287 = vsel %vm1255, %v1205, %v1271
    %v1288 = vsel %vm1256, %v1210, %v1272
    %v1289 = vsel %vm1257, %v1215, %v1273
    %v1290 = vsel %vm1258, %v1220, %v1274
    %v1291 = vsel %vm1259, %v1225, %v1275
    %v1292 = vsel %vm1260, %v1230, %v1276
    %v1293 = vsel %vm1261, %v1235, %v1277
    %v1294 = vsel %vm1262, %v1240, %v1278
    %v1295 = vsel %vm1263, %v1245, %v1279
    %1296 = vmatprep.subr.mxu0 0.0
    %1297 = vmatpush1.msra.mxu0 %v132
    %1298 = vmatprep.subr.mxu0 0.0
    %1299 = vmatpush1.msra.mxu0 %v133
    %1300 = vmatprep.subr.mxu0 0.0
    %1301 = vmatpush1.msra.mxu0 %v134
    %1302 = vmatprep.subr.mxu0 0.0
    %1303 = vmatpush1.msra.mxu0 %v135
    %1304 = vmatprep.subr.mxu0 0.0
    %1305 = vmatpush1.msra.mxu0 0.0
    %1306 = vmatprep.subr.mxu0 0.0
    %1307 = vmatpush1.msra.mxu0 0.0
    %1308 = vmatprep.subr.mxu0 0.0
    %1309 = vmatpush1.msra.mxu0 0.0
    %1310 = vmatprep.subr.mxu0 0.0
    %1311 = vmatpush1.msra.mxu0 0.0
    %1312 = vmatprep.subr.mxu0 0.0
    %1313 = vmatpush1.msra.mxu0 0.0
    %1314 = vmatprep.subr.mxu0 0.0
    %1315 = vmatpush1.msra.mxu0 0.0
    %1316 = vmatprep.subr.mxu0 0.0
    %1317 = vmatpush1.msra.mxu0 0.0
    %1318 = vmatprep.subr.mxu0 0.0
    %1319 = vmatpush1.msra.mxu0 0.0
    %1320 = vmatprep.subr.mxu0 0.0
    %1321 = vmatpush1.msra.mxu0 0.0
    %1322 = vmatprep.subr.mxu0 0.0
    %1323 = vmatpush1.msra.mxu0 0.0
    %1324 = vmatprep.subr.mxu0 0.0
    %1325 = vmatpush1.msra.mxu0 0.0
    %1326 = vmatprep.subr.mxu0 0.0
    %1327 = vmatpush1.msra.mxu0 0.0
    %1328 = vmatprep.subr.mxu0 0.0
    %1329 = vmatpush1.msra.mxu0 0.0
    %1330 = vmatprep.subr.mxu0 0.0
    %1331 = vmatpush1.msra.mxu0 0.0
    %1332 = vmatprep.subr.mxu0 0.0
    %1333 = vmatpush1.msra.mxu0 0.0
    %1334 = vmatprep.subr.mxu0 0.0
    %1335 = vmatpush1.msra.mxu0 0.0
    %1336 = vmatprep.subr.mxu0 0.0
    %1337 = vmatpush1.msra.mxu0 0.0
    %1338 = vmatprep.subr.mxu0 0.0
    %1339 = vmatpush1.msra.mxu0 0.0
    %1340 = vmatprep.subr.mxu0 0.0
    %1341 = vmatpush1.msra.mxu0 0.0
    %1342 = vmatprep.subr.mxu0 0.0
    %1343 = vmatpush1.msra.mxu0 0.0
    %1344 = vmatprep.subr.mxu0 0.0
    %1345 = vmatpush1.msra.mxu0 0.0
    %1346 = vmatprep.subr.mxu0 0.0
    %1347 = vmatpush1.msra.mxu0 0.0
    %1348 = vmatprep.subr.mxu0 0.0
    %1349 = vmatpush1.msra.mxu0 0.0
    %1350 = vmatprep.subr.mxu0 0.0
    %1351 = vmatpush1.msra.mxu0 0.0
    %1352 = vmatprep.subr.mxu0 0.0
    %1353 = vmatpush1.msra.mxu0 0.0
    %1354 = vmatprep.subr.mxu0 0.0
    %1355 = vmatpush1.msra.mxu0 0.0
    %1356 = vmatprep.subr.mxu0 0.0
    %1357 = vmatpush1.msra.mxu0 0.0
    %1358 = vmatprep.subr.mxu0 0.0
    %1359 = vmatpush1.msra.mxu0 0.0
    %1360 = vmatprep.mubr.f32.mxu0 0.0
    %1361 = vmatmul.mubr.f32.gmra.mrb[0].mxu0 %v911
    %v1362 = vpop.f32.mrb[0].mxu0
    %v1363 = vadd.f32 0.0, %v1362
    %v1364 = vpop.f32.mrb[0].mxu0
    %1365 = vmatprep.mubr.f32.mxu0 0.0
    %1366 = vmatmul.mubr.f32.gmra.mrb[0].mxu0 %v914
    %v1367 = vpop.f32.mrb[0].mxu0
    %v1368 = vadd.f32 0.0, %v1367
    %v1369 = vpop.f32.mrb[0].mxu0
    %1370 = vmatprep.mubr.f32.mxu0 0.0
    %1371 = vmatmul.mubr.f32.gmra.mrb[0].mxu0 %v917
    %v1372 = vpop.f32.mrb[0].mxu0
    %v1373 = vadd.f32 0.0, %v1372
    %v1374 = vpop.f32.mrb[0].mxu0
    %1375 = vmatprep.mubr.f32.mxu0 0.0
    %1376 = vmatmul.mubr.f32.gmra.mrb[0].mxu0 %v920
    %v1377 = vpop.f32.mrb[0].mxu0
    %v1378 = vadd.f32 0.0, %v1377
    %v1379 = vpop.f32.mrb[0].mxu0
    %1380 = vmatprep.mubr.f32.mxu0 0.0
    %1381 = vmatmul.mubr.f32.gmra.mrb[0].mxu0 %v923
    %v1382 = vpop.f32.mrb[0].mxu0
    %v1383 = vadd.f32 0.0, %v1382
    %v1384 = vpop.f32.mrb[0].mxu0
    %1385 = vmatprep.mubr.f32.mxu0 0.0
    %1386 = vmatmul.mubr.f32.gmra.mrb[0].mxu0 %v926
    %v1387 = vpop.f32.mrb[0].mxu0
    %v1388 = vadd.f32 0.0, %v1387
    %v1389 = vpop.f32.mrb[0].mxu0
    %1390 = vmatprep.mubr.f32.mxu0 0.0
    %1391 = vmatmul.mubr.f32.gmra.mrb[0].mxu0 %v929
    %v1392 = vpop.f32.mrb[0].mxu0
    %v1393 = vadd.f32 0.0, %v1392
    %v1394 = vpop.f32.mrb[0].mxu0
    %1395 = vmatprep.mubr.f32.mxu0 0.0
    %1396 = vmatmul.mubr.f32.gmra.mrb[0].mxu0 %v932
    %v1397 = vpop.f32.mrb[0].mxu0
    %v1398 = vadd.f32 0.0, %v1397
    %v1399 = vpop.f32.mrb[0].mxu0
    %1400 = vmatprep.mubr.f32.mxu0 0.0
    %1401 = vmatmul.mubr.f32.gmra.mrb[0].mxu0 %v935
    %v1402 = vpop.f32.mrb[0].mxu0
    %v1403 = vadd.f32 0.0, %v1402
    %v1404 = vpop.f32.mrb[0].mxu0
    %1405 = vmatprep.mubr.f32.mxu0 0.0
    %1406 = vmatmul.mubr.f32.gmra.mrb[0].mxu0 %v938
    %v1407 = vpop.f32.mrb[0].mxu0
    %v1408 = vadd.f32 0.0, %v1407
    %v1409 = vpop.f32.mrb[0].mxu0
    %1410 = vmatprep.mubr.f32.mxu0 0.0
    %1411 = vmatmul.mubr.f32.gmra.mrb[0].mxu0 %v941
    %v1412 = vpop.f32.mrb[0].mxu0
    %v1413 = vadd.f32 0.0, %v1412
    %v1414 = vpop.f32.mrb[0].mxu0
    %1415 = vmatprep.mubr.f32.mxu0 0.0
    %1416 = vmatmul.mubr.f32.gmra.mrb[0].mxu0 %v944
    %v1417 = vpop.f32.mrb[0].mxu0
    %v1418 = vadd.f32 0.0, %v1417
    %v1419 = vpop.f32.mrb[0].mxu0
    %1420 = vmatprep.mubr.f32.mxu0 0.0
    %1421 = vmatmul.mubr.f32.gmra.mrb[0].mxu0 %v947
    %v1422 = vpop.f32.mrb[0].mxu0
    %v1423 = vadd.f32 0.0, %v1422
    %v1424 = vpop.f32.mrb[0].mxu0
    %1425 = vmatprep.mubr.f32.mxu0 0.0
    %1426 = vmatmul.mubr.f32.gmra.mrb[0].mxu0 %v950
    %v1427 = vpop.f32.mrb[0].mxu0
    %v1428 = vadd.f32 0.0, %v1427
    %v1429 = vpop.f32.mrb[0].mxu0
    %1430 = vmatprep.mubr.f32.mxu0 0.0
    %1431 = vmatmul.mubr.f32.gmra.mrb[0].mxu0 %v953
    %v1432 = vpop.f32.mrb[0].mxu0
    %v1433 = vadd.f32 0.0, %v1432
    %v1434 = vpop.f32.mrb[0].mxu0
    %1435 = vmatprep.mubr.f32.mxu0 0.0
    %1436 = vmatmul.mubr.f32.gmra.mrb[0].mxu0 %v956
    %v1437 = vpop.f32.mrb[0].mxu0
    %v1438 = vadd.f32 0.0, %v1437
    %v1439 = vpop.f32.mrb[0].mxu0
    %1440 = vdwg.mxu0
    %1441 = vmatprep.subr.mxu0 0.0
    %1442 = vmatpush1.msra.mxu0 %v1363
    %1443 = vmatprep.subr.mxu0 0.0
    %1444 = vmatpush1.msra.mxu0 %v1368
    %1445 = vmatprep.subr.mxu0 0.0
    %1446 = vmatpush1.msra.mxu0 %v1373
    %1447 = vmatprep.subr.mxu0 0.0
    %1448 = vmatpush1.msra.mxu0 %v1378
    %1449 = vmatprep.subr.mxu0 0.0
    %1450 = vmatpush1.msra.mxu0 %v1383
    %1451 = vmatprep.subr.mxu0 0.0
    %1452 = vmatpush1.msra.mxu0 %v1388
    %1453 = vmatprep.subr.mxu0 0.0
    %1454 = vmatpush1.msra.mxu0 %v1393
    %1455 = vmatprep.subr.mxu0 0.0
    %1456 = vmatpush1.msra.mxu0 %v1398
    %1457 = vmatprep.subr.mxu0 0.0
    %1458 = vmatpush1.msra.mxu0 %v1403
    %1459 = vmatprep.subr.mxu0 0.0
    %1460 = vmatpush1.msra.mxu0 %v1408
    %1461 = vmatprep.subr.mxu0 0.0
    %1462 = vmatpush1.msra.mxu0 %v1413
    %1463 = vmatprep.subr.mxu0 0.0
    %1464 = vmatpush1.msra.mxu0 %v1418
    %1465 = vmatprep.subr.mxu0 0.0
    %1466 = vmatpush1.msra.mxu0 %v1423
    %1467 = vmatprep.subr.mxu0 0.0
    %1468 = vmatpush1.msra.mxu0 %v1428
    %1469 = vmatprep.subr.mxu0 0.0
    %1470 = vmatpush1.msra.mxu0 %v1433
    %1471 = vmatprep.subr.mxu0 0.0
    %1472 = vmatpush1.msra.mxu0 %v1438
    %1473 = vmatprep.subr.mxu0 0.0
    %1474 = vmatpush1.msra.mxu0 0.0
    %1475 = vmatprep.subr.mxu0 0.0
    %1476 = vmatpush1.msra.mxu0 0.0
    %1477 = vmatprep.subr.mxu0 0.0
    %1478 = vmatpush1.msra.mxu0 0.0
    %1479 = vmatprep.subr.mxu0 0.0
    %1480 = vmatpush1.msra.mxu0 0.0
    %1481 = vmatprep.subr.mxu0 0.0
    %1482 = vmatpush1.msra.mxu0 0.0
    %1483 = vmatprep.subr.mxu0 0.0
    %1484 = vmatpush1.msra.mxu0 0.0
    %1485 = vmatprep.subr.mxu0 0.0
    %1486 = vmatpush1.msra.mxu0 0.0
    %1487 = vmatprep.subr.mxu0 0.0
    %1488 = vmatpush1.msra.mxu0 0.0
    %1489 = vmatprep.subr.mxu0 0.0
    %1490 = vmatpush1.msra.mxu0 0.0
    %1491 = vmatprep.subr.mxu0 0.0
    %1492 = vmatpush1.msra.mxu0 0.0
    %1493 = vmatprep.subr.mxu0 0.0
    %1494 = vmatpush1.msra.mxu0 0.0
    %1495 = vmatprep.subr.mxu0 0.0
    %1496 = vmatpush1.msra.mxu0 0.0
    %1497 = vmatprep.subr.mxu0 0.0
    %1498 = vmatpush1.msra.mxu0 0.0
    %1499 = vmatprep.subr.mxu0 0.0
    %1500 = vmatpush1.msra.mxu0 0.0
    %1501 = vmatprep.subr.mxu0 0.0
    %1502 = vmatpush1.msra.mxu0 0.0
    %1503 = vmatprep.subr.mxu0 0.0
    %1504 = vmatpush1.msra.mxu0 0.0
    %1505 = vmatprep.mubr.f32.mxu0 0.0
    %1506 = vmatmul.mubr.f32.gmra.mrb[0].mxu0 %v78
    %v1507 = vpop.f32.mrb[0].mxu0
    %v1508 = vadd.f32 %v706, %v1507
    %v1509 = vpop.f32.mrb[0].mxu0
    %1510 = vmatprep.mubr.f32.mxu0 0.0
    %1511 = vmatmul.mubr.f32.gmra.mrb[0].mxu0 %v79
    %v1512 = vpop.f32.mrb[0].mxu0
    %v1513 = vadd.f32 %v706, %v1512
    %v1514 = vpop.f32.mrb[0].mxu0
    %1515 = vmatprep.mubr.f32.mxu0 0.0
    %1516 = vmatmul.mubr.f32.gmra.mrb[0].mxu0 %v80
    %v1517 = vpop.f32.mrb[0].mxu0
    %v1518 = vadd.f32 %v706, %v1517
    %v1519 = vpop.f32.mrb[0].mxu0
    %1520 = vmatprep.mubr.f32.mxu0 0.0
    %1521 = vmatmul.mubr.f32.gmra.mrb[0].mxu0 %v81
    %v1522 = vpop.f32.mrb[0].mxu0
    %v1523 = vadd.f32 %v706, %v1522
    %v1524 = vpop.f32.mrb[0].mxu0
    %1525 = vmatprep.mubr.f32.mxu0 0.0
    %1526 = vmatmul.mubr.f32.gmra.mrb[0].mxu0 %v82
    %v1527 = vpop.f32.mrb[0].mxu0
    %v1528 = vadd.f32 %v706, %v1527
    %v1529 = vpop.f32.mrb[0].mxu0
    %1530 = vmatprep.mubr.f32.mxu0 0.0
    %1531 = vmatmul.mubr.f32.gmra.mrb[0].mxu0 %v83
    %v1532 = vpop.f32.mrb[0].mxu0
    %v1533 = vadd.f32 %v706, %v1532
    %v1534 = vpop.f32.mrb[0].mxu0
    %1535 = vmatprep.mubr.f32.mxu0 0.0
    %1536 = vmatmul.mubr.f32.gmra.mrb[0].mxu0 %v84
    %v1537 = vpop.f32.mrb[0].mxu0
    %v1538 = vadd.f32 %v706, %v1537
    %v1539 = vpop.f32.mrb[0].mxu0
    %1540 = vmatprep.mubr.f32.mxu0 0.0
    %1541 = vmatmul.mubr.f32.gmra.mrb[0].mxu0 %v85
    %v1542 = vpop.f32.mrb[0].mxu0
    %v1543 = vadd.f32 %v706, %v1542
    %v1544 = vpop.f32.mrb[0].mxu0
    %1545 = vmatprep.mubr.f32.mxu0 0.0
    %1546 = vmatmul.mubr.f32.gmra.mrb[0].mxu0 %v86
    %v1547 = vpop.f32.mrb[0].mxu0
    %v1548 = vadd.f32 %v706, %v1547
    %v1549 = vpop.f32.mrb[0].mxu0
    %1550 = vmatprep.mubr.f32.mxu0 0.0
    %1551 = vmatmul.mubr.f32.gmra.mrb[0].mxu0 %v87
    %v1552 = vpop.f32.mrb[0].mxu0
    %v1553 = vadd.f32 %v706, %v1552
    %v1554 = vpop.f32.mrb[0].mxu0
    %1555 = vmatprep.mubr.f32.mxu0 0.0
    %1556 = vmatmul.mubr.f32.gmra.mrb[0].mxu0 %v88
    %v1557 = vpop.f32.mrb[0].mxu0
    %v1558 = vadd.f32 %v706, %v1557
    %v1559 = vpop.f32.mrb[0].mxu0
    %1560 = vmatprep.mubr.f32.mxu0 0.0
    %1561 = vmatmul.mubr.f32.gmra.mrb[0].mxu0 %v89
    %v1562 = vpop.f32.mrb[0].mxu0
    %v1563 = vadd.f32 %v706, %v1562
    %v1564 = vpop.f32.mrb[0].mxu0
    %1565 = vmatprep.mubr.f32.mxu0 0.0
    %1566 = vmatmul.mubr.f32.gmra.mrb[0].mxu0 %v90
    %v1567 = vpop.f32.mrb[0].mxu0
    %v1568 = vadd.f32 %v706, %v1567
    %v1569 = vpop.f32.mrb[0].mxu0
    %1570 = vmatprep.mubr.f32.mxu0 0.0
    %1571 = vmatmul.mubr.f32.gmra.mrb[0].mxu0 %v91
    %v1572 = vpop.f32.mrb[0].mxu0
    %v1573 = vadd.f32 %v706, %v1572
    %v1574 = vpop.f32.mrb[0].mxu0
    %1575 = vmatprep.mubr.f32.mxu0 0.0
    %1576 = vmatmul.mubr.f32.gmra.mrb[0].mxu0 %v92
    %v1577 = vpop.f32.mrb[0].mxu0
    %v1578 = vadd.f32 %v706, %v1577
    %v1579 = vpop.f32.mrb[0].mxu0
    %1580 = vmatprep.mubr.f32.mxu0 0.0
    %1581 = vmatmul.mubr.f32.gmra.mrb[0].mxu0 %v93
    %v1582 = vpop.f32.mrb[0].mxu0
    %v1583 = vadd.f32 %v706, %v1582
    %v1584 = vpop.f32.mrb[0].mxu0
    %1585 = vdwg.mxu0
    %vm1586 = vcmp.gt.f32.partialorder %v1508, 0.0
    %vm1587 = vcmp.gt.f32.partialorder %v1513, 0.0
    %vm1588 = vcmp.gt.f32.partialorder %v1518, 0.0
    %vm1589 = vcmp.gt.f32.partialorder %v1523, 0.0
    %vm1590 = vcmp.gt.f32.partialorder %v1528, 0.0
    %vm1591 = vcmp.gt.f32.partialorder %v1533, 0.0
    %vm1592 = vcmp.gt.f32.partialorder %v1538, 0.0
    %vm1593 = vcmp.gt.f32.partialorder %v1543, 0.0
    %vm1594 = vcmp.gt.f32.partialorder %v1548, 0.0
    %vm1595 = vcmp.gt.f32.partialorder %v1553, 0.0
    %vm1596 = vcmp.gt.f32.partialorder %v1558, 0.0
    %vm1597 = vcmp.gt.f32.partialorder %v1563, 0.0
    %vm1598 = vcmp.gt.f32.partialorder %v1568, 0.0
    %vm1599 = vcmp.gt.f32.partialorder %v1573, 0.0
    %vm1600 = vcmp.gt.f32.partialorder %v1578, 0.0
    %vm1601 = vcmp.gt.f32.partialorder %v1583, 0.0
    %v1602 = vmul.f32 %v876, %v1508
    %v1603 = vmul.f32 %v876, %v1513
    %v1604 = vmul.f32 %v876, %v1518
    %v1605 = vmul.f32 %v876, %v1523
    %v1606 = vmul.f32 %v876, %v1528
    %v1607 = vmul.f32 %v876, %v1533
    %v1608 = vmul.f32 %v876, %v1538
    %v1609 = vmul.f32 %v876, %v1543
    %v1610 = vmul.f32 %v876, %v1548
    %v1611 = vmul.f32 %v876, %v1553
    %v1612 = vmul.f32 %v876, %v1558
    %v1613 = vmul.f32 %v876, %v1563
    %v1614 = vmul.f32 %v876, %v1568
    %v1615 = vmul.f32 %v876, %v1573
    %v1616 = vmul.f32 %v876, %v1578
    %v1617 = vmul.f32 %v876, %v1583
    %v1618 = vsel %vm1586, %v1508, %v1602
    %v1619 = vsel %vm1587, %v1513, %v1603
    %v1620 = vsel %vm1588, %v1518, %v1604
    %v1621 = vsel %vm1589, %v1523, %v1605
    %v1622 = vsel %vm1590, %v1528, %v1606
    %v1623 = vsel %vm1591, %v1533, %v1607
    %v1624 = vsel %vm1592, %v1538, %v1608
    %v1625 = vsel %vm1593, %v1543, %v1609
    %v1626 = vsel %vm1594, %v1548, %v1610
    %v1627 = vsel %vm1595, %v1553, %v1611
    %v1628 = vsel %vm1596, %v1558, %v1612
    %v1629 = vsel %vm1597, %v1563, %v1613
    %v1630 = vsel %vm1598, %v1568, %v1614
    %v1631 = vsel %vm1599, %v1573, %v1615
    %v1632 = vsel %vm1600, %v1578, %v1616
    %v1633 = vsel %vm1601, %v1583, %v1617
    %v1634 = vadd.f32 %v541, %v542
    %v1635 = vadd.f32 %v1634, %v543
    %v1636 = vadd.f32 %v1635, %v544
    %v1637 = vadd.f32 %v1636, %v545
    %v1638 = vadd.f32 %v1637, %v546
    %v1639 = vadd.f32 %v1638, %v547
    %v1640 = vadd.f32 %v1639, %v548
    %v1641 = vadd.f32 %v1640, %v549
    %v1642 = vadd.f32 %v1641, %v550
    %v1643 = vadd.f32 %v1642, %v551
    %v1644 = vadd.f32 %v1643, %v552
    %v1645 = vadd.f32 %v1644, %v553
    %v1646 = vadd.f32 %v1645, %v554
    %v1647 = vadd.f32 %v1646, %v555
    %v1648 = vadd.f32 %v1647, %v556
    %v1649 = vrot.slane %v1648, 4
    %v1650 = vadd.f32 %v1648, %v1649
    %v1651 = vrot.slane %v1650, 2
    %v1652 = vadd.f32 %v1650, %v1651
    %v1653 = vrot.slane %v1652, 1
    %v1654 = vadd.f32 %v1652, %v1653
    %v1655 = vmul.f32 %v1654, 0.0078125
    %v1656 = vadd.f32 %v894, %v895
    %v1657 = vadd.f32 %v1656, %v896
    %v1658 = vadd.f32 %v1657, %v897
    %v1659 = vadd.f32 %v1658, %v898
    %v1660 = vadd.f32 %v1659, %v899
    %v1661 = vadd.f32 %v1660, %v900
    %v1662 = vadd.f32 %v1661, %v901
    %v1663 = vadd.f32 %v1662, %v902
    %v1664 = vadd.f32 %v1663, %v903
    %v1665 = vadd.f32 %v1664, %v904
    %v1666 = vadd.f32 %v1665, %v905
    %v1667 = vadd.f32 %v1666, %v906
    %v1668 = vadd.f32 %v1667, %v907
    %v1669 = vadd.f32 %v1668, %v908
    %v1670 = vadd.f32 %v1669, %v909
    %v1671 = vrot.slane %v1670, 4
    %v1672 = vadd.f32 %v1670, %v1671
    %v1673 = vrot.slane %v1672, 2
    %v1674 = vadd.f32 %v1672, %v1673
    %v1675 = vrot.slane %v1674, 1
    %v1676 = vadd.f32 %v1674, %v1675
    %v1677 = vmul.f32 %v1676, 0.0078125
    %v1678 = vsub.f32 0.0, %v1655
    %v1679 = vmul.f32 %v1678, 1.442695
    %v1680 = vpow.pop %v1679
    %v1681 = vadd.f32 %v1680, 1.0
    %v1682 = vrcp.pop %v1681
    %v1683 = vmul.f32 1.0, %v1682
    %v1684 = vsub.f32 0.0, %v1677
    %v1685 = vmul.f32 %v1684, 1.442695
    %v1686 = vpow.pop %v1685
    %v1687 = vadd.f32 %v1686, 1.0
    %v1688 = vrcp.pop %v1687
    %v1689 = vmul.f32 1.0, %v1688
    %1690 = vmatprep.subr.mxu0 0.0
    %1691 = vmatpush1.xpose.msra.mxu0 %v138
    %1692 = vmatprep.subr.mxu0 0.0
    %1693 = vmatpush1.xpose.msra.mxu0 %v139
    %1694 = vmatprep.subr.mxu0 0.0
    %1695 = vmatpush1.xpose.msra.mxu0 %v140
    %1696 = vmatprep.subr.mxu0 0.0
    %1697 = vmatpush1.xpose.msra.mxu0 %v141
    %1698 = vmatprep.subr.mxu0 0.0
    %1699 = vmatpush1.xpose.msra.mxu0 %v142
    %1700 = vmatprep.subr.mxu0 0.0
    %1701 = vmatpush1.xpose.msra.mxu0 %v143
    %1702 = vmatprep.subr.mxu0 0.0
    %1703 = vmatpush1.xpose.msra.mxu0 %v144
    %1704 = vmatprep.subr.mxu0 0.0
    %1705 = vmatpush1.xpose.msra.mxu0 %v145
    %1706 = vmatprep.subr.mxu0 0.0
    %1707 = vmatpush1.xpose.msra.mxu0 %v146
    %1708 = vmatprep.subr.mxu0 0.0
    %1709 = vmatpush1.xpose.msra.mxu0 %v147
    %1710 = vmatprep.subr.mxu0 0.0
    %1711 = vmatpush1.xpose.msra.mxu0 %v148
    %1712 = vmatprep.subr.mxu0 0.0
    %1713 = vmatpush1.xpose.msra.mxu0 %v149
    %1714 = vmatprep.subr.mxu0 0.0
    %1715 = vmatpush1.xpose.msra.mxu0 %v150
    %1716 = vmatprep.subr.mxu0 0.0
    %1717 = vmatpush1.xpose.msra.mxu0 %v151
    %1718 = vmatprep.subr.mxu0 0.0
    %1719 = vmatpush1.xpose.msra.mxu0 %v152
    %1720 = vmatprep.subr.mxu0 0.0
    %1721 = vmatpush1.xpose.msra.mxu0 %v153
    %1722 = vmatprep.subr.mxu0 0.0
    %1723 = vmatpush1.xpose.msra.mxu0 0.0
    %1724 = vmatprep.subr.mxu0 0.0
    %1725 = vmatpush1.xpose.msra.mxu0 0.0
    %1726 = vmatprep.subr.mxu0 0.0
    %1727 = vmatpush1.xpose.msra.mxu0 0.0
    %1728 = vmatprep.subr.mxu0 0.0
    %1729 = vmatpush1.xpose.msra.mxu0 0.0
    %1730 = vmatprep.subr.mxu0 0.0
    %1731 = vmatpush1.xpose.msra.mxu0 0.0
    %1732 = vmatprep.subr.mxu0 0.0
    %1733 = vmatpush1.xpose.msra.mxu0 0.0
    %1734 = vmatprep.subr.mxu0 0.0
    %1735 = vmatpush1.xpose.msra.mxu0 0.0
    %1736 = vmatprep.subr.mxu0 0.0
    %1737 = vmatpush1.xpose.msra.mxu0 0.0
    %1738 = vmatprep.subr.mxu0 0.0
    %1739 = vmatpush1.xpose.msra.mxu0 0.0
    %1740 = vmatprep.subr.mxu0 0.0
    %1741 = vmatpush1.xpose.msra.mxu0 0.0
    %1742 = vmatprep.subr.mxu0 0.0
    %1743 = vmatpush1.xpose.msra.mxu0 0.0
    %1744 = vmatprep.subr.mxu0 0.0
    %1745 = vmatpush1.xpose.msra.mxu0 0.0
    %1746 = vmatprep.subr.mxu0 0.0
    %1747 = vmatpush1.xpose.msra.mxu0 0.0
    %1748 = vmatprep.subr.mxu0 0.0
    %1749 = vmatpush1.xpose.msra.mxu0 0.0
    %1750 = vmatprep.subr.mxu0 0.0
    %1751 = vmatpush1.xpose.msra.mxu0 0.0
    %1752 = vmatprep.subr.mxu0 0.0
    %1753 = vmatpush1.xpose.msra.mxu0 0.0
    %1754 = vmatprep.mubr.f32.mxu0 0.0
    %1755 = vmatmul.mubr.f32.gmra.mrb[0].mxu0 %v1683
    %v1756 = vpop.f32.mrb[0].mxu0
    %v1757 = vadd.f32 0.0, %v1756
    %v1758 = vpop.f32.mrb[0].mxu0
    %1759 = vdwg.mxu0
    %1760 = vmatprep.subr.mxu0 0.0
    %1761 = vmatpush1.xpose.msra.mxu0 %v138
    %1762 = vmatprep.subr.mxu0 0.0
    %1763 = vmatpush1.xpose.msra.mxu0 %v139
    %1764 = vmatprep.subr.mxu0 0.0
    %1765 = vmatpush1.xpose.msra.mxu0 %v140
    %1766 = vmatprep.subr.mxu0 0.0
    %1767 = vmatpush1.xpose.msra.mxu0 %v141
    %1768 = vmatprep.subr.mxu0 0.0
    %1769 = vmatpush1.xpose.msra.mxu0 %v142
    %1770 = vmatprep.subr.mxu0 0.0
    %1771 = vmatpush1.xpose.msra.mxu0 %v143
    %1772 = vmatprep.subr.mxu0 0.0
    %1773 = vmatpush1.xpose.msra.mxu0 %v144
    %1774 = vmatprep.subr.mxu0 0.0
    %1775 = vmatpush1.xpose.msra.mxu0 %v145
    %1776 = vmatprep.subr.mxu0 0.0
    %1777 = vmatpush1.xpose.msra.mxu0 %v146
    %1778 = vmatprep.subr.mxu0 0.0
    %1779 = vmatpush1.xpose.msra.mxu0 %v147
    %1780 = vmatprep.subr.mxu0 0.0
    %1781 = vmatpush1.xpose.msra.mxu0 %v148
    %1782 = vmatprep.subr.mxu0 0.0
    %1783 = vmatpush1.xpose.msra.mxu0 %v149
    %1784 = vmatprep.subr.mxu0 0.0
    %1785 = vmatpush1.xpose.msra.mxu0 %v150
    %1786 = vmatprep.subr.mxu0 0.0
    %1787 = vmatpush1.xpose.msra.mxu0 %v151
    %1788 = vmatprep.subr.mxu0 0.0
    %1789 = vmatpush1.xpose.msra.mxu0 %v152
    %1790 = vmatprep.subr.mxu0 0.0
    %1791 = vmatpush1.xpose.msra.mxu0 %v153
    %1792 = vmatprep.subr.mxu0 0.0
    %1793 = vmatpush1.xpose.msra.mxu0 0.0
    %1794 = vmatprep.subr.mxu0 0.0
    %1795 = vmatpush1.xpose.msra.mxu0 0.0
    %1796 = vmatprep.subr.mxu0 0.0
    %1797 = vmatpush1.xpose.msra.mxu0 0.0
    %1798 = vmatprep.subr.mxu0 0.0
    %1799 = vmatpush1.xpose.msra.mxu0 0.0
    %1800 = vmatprep.subr.mxu0 0.0
    %1801 = vmatpush1.xpose.msra.mxu0 0.0
    %1802 = vmatprep.subr.mxu0 0.0
    %1803 = vmatpush1.xpose.msra.mxu0 0.0
    %1804 = vmatprep.subr.mxu0 0.0
    %1805 = vmatpush1.xpose.msra.mxu0 0.0
    %1806 = vmatprep.subr.mxu0 0.0
    %1807 = vmatpush1.xpose.msra.mxu0 0.0
    %1808 = vmatprep.subr.mxu0 0.0
    %1809 = vmatpush1.xpose.msra.mxu0 0.0
    %1810 = vmatprep.subr.mxu0 0.0
    %1811 = vmatpush1.xpose.msra.mxu0 0.0
    %1812 = vmatprep.subr.mxu0 0.0
    %1813 = vmatpush1.xpose.msra.mxu0 0.0
    %1814 = vmatprep.subr.mxu0 0.0
    %1815 = vmatpush1.xpose.msra.mxu0 0.0
    %1816 = vmatprep.subr.mxu0 0.0
    %1817 = vmatpush1.xpose.msra.mxu0 0.0
    %1818 = vmatprep.subr.mxu0 0.0
    %1819 = vmatpush1.xpose.msra.mxu0 0.0
    %1820 = vmatprep.subr.mxu0 0.0
    %1821 = vmatpush1.xpose.msra.mxu0 0.0
    %1822 = vmatprep.subr.mxu0 0.0
    %1823 = vmatpush1.xpose.msra.mxu0 0.0
    %1824 = vmatprep.mubr.f32.mxu0 0.0
    %1825 = vmatmul.mubr.f32.gmra.mrb[0].mxu0 %v1689
    %v1826 = vpop.f32.mrb[0].mxu0
    %v1827 = vadd.f32 0.0, %v1826
    %v1828 = vpop.f32.mrb[0].mxu0
    %1829 = vdwg.mxu0
    %1831 = vset.pattern.permute.xlu0 0
    %1832 = vperm.xlu0 %1831, %v154
    %v1833 = vpop.permute.xlu0 %1832
    %v1835 = vlaneseq
    %v1836 = vshrl.u32 %v1835, 7
    %v1837 = vsub.s32 0, %v1836
    %v1838 = vrot.slane %v1833, %v1837
    %1839 = vmatprep.subr.mxu0 0.0
    %1840 = vmatpush1.xpose.msra.mxu0 %v894
    %1841 = vmatprep.subr.mxu0 0.0
    %1842 = vmatpush1.xpose.msra.mxu0 %v895
    %1843 = vmatprep.subr.mxu0 0.0
    %1844 = vmatpush1.xpose.msra.mxu0 %v896
    %1845 = vmatprep.subr.mxu0 0.0
    %1846 = vmatpush1.xpose.msra.mxu0 %v897
    %1847 = vmatprep.subr.mxu0 0.0
    %1848 = vmatpush1.xpose.msra.mxu0 %v898
    %1849 = vmatprep.subr.mxu0 0.0
    %1850 = vmatpush1.xpose.msra.mxu0 %v899
    %1851 = vmatprep.subr.mxu0 0.0
    %1852 = vmatpush1.xpose.msra.mxu0 %v900
    %1853 = vmatprep.subr.mxu0 0.0
    %1854 = vmatpush1.xpose.msra.mxu0 %v901
    %1855 = vmatprep.subr.mxu0 0.0
    %1856 = vmatpush1.xpose.msra.mxu0 %v902
    %1857 = vmatprep.subr.mxu0 0.0
    %1858 = vmatpush1.xpose.msra.mxu0 %v903
    %1859 = vmatprep.subr.mxu0 0.0
    %1860 = vmatpush1.xpose.msra.mxu0 %v904
    %1861 = vmatprep.subr.mxu0 0.0
    %1862 = vmatpush1.xpose.msra.mxu0 %v905
    %1863 = vmatprep.subr.mxu0 0.0
    %1864 = vmatpush1.xpose.msra.mxu0 %v906
    %1865 = vmatprep.subr.mxu0 0.0
    %1866 = vmatpush1.xpose.msra.mxu0 %v907
    %1867 = vmatprep.subr.mxu0 0.0
    %1868 = vmatpush1.xpose.msra.mxu0 %v908
    %1869 = vmatprep.subr.mxu0 0.0
    %1870 = vmatpush1.xpose.msra.mxu0 %v909
    %1871 = vmatprep.subr.mxu0 0.0
    %1872 = vmatpush1.xpose.msra.mxu0 0.0
    %1873 = vmatprep.subr.mxu0 0.0
    %1874 = vmatpush1.xpose.msra.mxu0 0.0
    %1875 = vmatprep.subr.mxu0 0.0
    %1876 = vmatpush1.xpose.msra.mxu0 0.0
    %1877 = vmatprep.subr.mxu0 0.0
    %1878 = vmatpush1.xpose.msra.mxu0 0.0
    %1879 = vmatprep.subr.mxu0 0.0
    %1880 = vmatpush1.xpose.msra.mxu0 0.0
    %1881 = vmatprep.subr.mxu0 0.0
    %1882 = vmatpush1.xpose.msra.mxu0 0.0
    %1883 = vmatprep.subr.mxu0 0.0
    %1884 = vmatpush1.xpose.msra.mxu0 0.0
    %1885 = vmatprep.subr.mxu0 0.0
    %1886 = vmatpush1.xpose.msra.mxu0 0.0
    %1887 = vmatprep.subr.mxu0 0.0
    %1888 = vmatpush1.xpose.msra.mxu0 0.0
    %1889 = vmatprep.subr.mxu0 0.0
    %1890 = vmatpush1.xpose.msra.mxu0 0.0
    %1891 = vmatprep.subr.mxu0 0.0
    %1892 = vmatpush1.xpose.msra.mxu0 0.0
    %1893 = vmatprep.subr.mxu0 0.0
    %1894 = vmatpush1.xpose.msra.mxu0 0.0
    %1895 = vmatprep.subr.mxu0 0.0
    %1896 = vmatpush1.xpose.msra.mxu0 0.0
    %1897 = vmatprep.subr.mxu0 0.0
    %1898 = vmatpush1.xpose.msra.mxu0 0.0
    %1899 = vmatprep.subr.mxu0 0.0
    %1900 = vmatpush1.xpose.msra.mxu0 0.0
    %1901 = vmatprep.subr.mxu0 0.0
    %1902 = vmatpush1.xpose.msra.mxu0 0.0
    %1903 = vmatprep.mubr.f32.mxu0 0.0
    %1904 = vmatmul.mubr.f32.gmra.mrb[0].mxu0 %v1757
    %v1905 = vpop.f32.mrb[0].mxu0
    %v1906 = vadd.f32 %v1838, %v1905
    %v1907 = vpop.f32.mrb[0].mxu0
    %1908 = vdwg.mxu0
    %1909 = vmatprep.subr.mxu0 0.0
    %1910 = vmatpush1.xpose.msra.mxu0 %v541
    %1911 = vmatprep.subr.mxu0 0.0
    %1912 = vmatpush1.xpose.msra.mxu0 %v542
    %1913 = vmatprep.subr.mxu0 0.0
    %1914 = vmatpush1.xpose.msra.mxu0 %v543
    %1915 = vmatprep.subr.mxu0 0.0
    %1916 = vmatpush1.xpose.msra.mxu0 %v544
    %1917 = vmatprep.subr.mxu0 0.0
    %1918 = vmatpush1.xpose.msra.mxu0 %v545
    %1919 = vmatprep.subr.mxu0 0.0
    %1920 = vmatpush1.xpose.msra.mxu0 %v546
    %1921 = vmatprep.subr.mxu0 0.0
    %1922 = vmatpush1.xpose.msra.mxu0 %v547
    %1923 = vmatprep.subr.mxu0 0.0
    %1924 = vmatpush1.xpose.msra.mxu0 %v548
    %1925 = vmatprep.subr.mxu0 0.0
    %1926 = vmatpush1.xpose.msra.mxu0 %v549
    %1927 = vmatprep.subr.mxu0 0.0
    %1928 = vmatpush1.xpose.msra.mxu0 %v550
    %1929 = vmatprep.subr.mxu0 0.0
    %1930 = vmatpush1.xpose.msra.mxu0 %v551
    %1931 = vmatprep.subr.mxu0 0.0
    %1932 = vmatpush1.xpose.msra.mxu0 %v552
    %1933 = vmatprep.subr.mxu0 0.0
    %1934 = vmatpush1.xpose.msra.mxu0 %v553
    %1935 = vmatprep.subr.mxu0 0.0
    %1936 = vmatpush1.xpose.msra.mxu0 %v554
    %1937 = vmatprep.subr.mxu0 0.0
    %1938 = vmatpush1.xpose.msra.mxu0 %v555
    %1939 = vmatprep.subr.mxu0 0.0
    %1940 = vmatpush1.xpose.msra.mxu0 %v556
    %1941 = vmatprep.subr.mxu0 0.0
    %1942 = vmatpush1.xpose.msra.mxu0 0.0
    %1943 = vmatprep.subr.mxu0 0.0
    %1944 = vmatpush1.xpose.msra.mxu0 0.0
    %1945 = vmatprep.subr.mxu0 0.0
    %1946 = vmatpush1.xpose.msra.mxu0 0.0
    %1947 = vmatprep.subr.mxu0 0.0
    %1948 = vmatpush1.xpose.msra.mxu0 0.0
    %1949 = vmatprep.subr.mxu0 0.0
    %1950 = vmatpush1.xpose.msra.mxu0 0.0
    %1951 = vmatprep.subr.mxu0 0.0
    %1952 = vmatpush1.xpose.msra.mxu0 0.0
    %1953 = vmatprep.subr.mxu0 0.0
    %1954 = vmatpush1.xpose.msra.mxu0 0.0
    %1955 = vmatprep.subr.mxu0 0.0
    %1956 = vmatpush1.xpose.msra.mxu0 0.0
    %1957 = vmatprep.subr.mxu0 0.0
    %1958 = vmatpush1.xpose.msra.mxu0 0.0
    %1959 = vmatprep.subr.mxu0 0.0
    %1960 = vmatpush1.xpose.msra.mxu0 0.0
    %1961 = vmatprep.subr.mxu0 0.0
    %1962 = vmatpush1.xpose.msra.mxu0 0.0
    %1963 = vmatprep.subr.mxu0 0.0
    %1964 = vmatpush1.xpose.msra.mxu0 0.0
    %1965 = vmatprep.subr.mxu0 0.0
    %1966 = vmatpush1.xpose.msra.mxu0 0.0
    %1967 = vmatprep.subr.mxu0 0.0
    %1968 = vmatpush1.xpose.msra.mxu0 0.0
    %1969 = vmatprep.subr.mxu0 0.0
    %1970 = vmatpush1.xpose.msra.mxu0 0.0
    %1971 = vmatprep.subr.mxu0 0.0
    %1972 = vmatpush1.xpose.msra.mxu0 0.0
    %1973 = vmatprep.mubr.f32.mxu0 0.0
    %1974 = vmatmul.mubr.f32.gmra.mrb[0].mxu0 %v1827
    %v1975 = vpop.f32.mrb[0].mxu0
    %v1976 = vadd.f32 %v1838, %v1975
    %v1977 = vpop.f32.mrb[0].mxu0
    %1978 = vdwg.mxu0
    %1979 = vmatprep.subr.mxu0 0.0
    %1980 = vmatpush1.xpose.msra.mxu0 %v1618
    %1981 = vmatprep.subr.mxu0 0.0
    %1982 = vmatpush1.xpose.msra.mxu0 %v1619
    %1983 = vmatprep.subr.mxu0 0.0
    %1984 = vmatpush1.xpose.msra.mxu0 %v1620
    %1985 = vmatprep.subr.mxu0 0.0
    %1986 = vmatpush1.xpose.msra.mxu0 %v1621
    %1987 = vmatprep.subr.mxu0 0.0
    %1988 = vmatpush1.xpose.msra.mxu0 %v1622
    %1989 = vmatprep.subr.mxu0 0.0
    %1990 = vmatpush1.xpose.msra.mxu0 %v1623
    %1991 = vmatprep.subr.mxu0 0.0
    %1992 = vmatpush1.xpose.msra.mxu0 %v1624
    %1993 = vmatprep.subr.mxu0 0.0
    %1994 = vmatpush1.xpose.msra.mxu0 %v1625
    %1995 = vmatprep.subr.mxu0 0.0
    %1996 = vmatpush1.xpose.msra.mxu0 %v1626
    %1997 = vmatprep.subr.mxu0 0.0
    %1998 = vmatpush1.xpose.msra.mxu0 %v1627
    %1999 = vmatprep.subr.mxu0 0.0
    %2000 = vmatpush1.xpose.msra.mxu0 %v1628
    %2001 = vmatprep.subr.mxu0 0.0
    %2002 = vmatpush1.xpose.msra.mxu0 %v1629
    %2003 = vmatprep.subr.mxu0 0.0
    %2004 = vmatpush1.xpose.msra.mxu0 %v1630
    %2005 = vmatprep.subr.mxu0 0.0
    %2006 = vmatpush1.xpose.msra.mxu0 %v1631
    %2007 = vmatprep.subr.mxu0 0.0
    %2008 = vmatpush1.xpose.msra.mxu0 %v1632
    %2009 = vmatprep.subr.mxu0 0.0
    %2010 = vmatpush1.xpose.msra.mxu0 %v1633
    %2011 = vmatprep.subr.mxu0 0.0
    %2012 = vmatpush1.xpose.msra.mxu0 0.0
    %2013 = vmatprep.subr.mxu0 0.0
    %2014 = vmatpush1.xpose.msra.mxu0 0.0
    %2015 = vmatprep.subr.mxu0 0.0
    %2016 = vmatpush1.xpose.msra.mxu0 0.0
    %2017 = vmatprep.subr.mxu0 0.0
    %2018 = vmatpush1.xpose.msra.mxu0 0.0
    %2019 = vmatprep.subr.mxu0 0.0
    %2020 = vmatpush1.xpose.msra.mxu0 0.0
    %2021 = vmatprep.subr.mxu0 0.0
    %2022 = vmatpush1.xpose.msra.mxu0 0.0
    %2023 = vmatprep.subr.mxu0 0.0
    %2024 = vmatpush1.xpose.msra.mxu0 0.0
    %2025 = vmatprep.subr.mxu0 0.0
    %2026 = vmatpush1.xpose.msra.mxu0 0.0
    %2027 = vmatprep.subr.mxu0 0.0
    %2028 = vmatpush1.xpose.msra.mxu0 0.0
    %2029 = vmatprep.subr.mxu0 0.0
    %2030 = vmatpush1.xpose.msra.mxu0 0.0
    %2031 = vmatprep.subr.mxu0 0.0
    %2032 = vmatpush1.xpose.msra.mxu0 0.0
    %2033 = vmatprep.subr.mxu0 0.0
    %2034 = vmatpush1.xpose.msra.mxu0 0.0
    %2035 = vmatprep.subr.mxu0 0.0
    %2036 = vmatpush1.xpose.msra.mxu0 0.0
    %2037 = vmatprep.subr.mxu0 0.0
    %2038 = vmatpush1.xpose.msra.mxu0 0.0
    %2039 = vmatprep.subr.mxu0 0.0
    %2040 = vmatpush1.xpose.msra.mxu0 0.0
    %2041 = vmatprep.subr.mxu0 0.0
    %2042 = vmatpush1.xpose.msra.mxu0 0.0
    %2043 = vmatprep.mubr.f32.mxu0 0.0
    %2044 = vmatmul.mubr.f32.gmra.mrb[0].mxu0 %v1757
    %v2045 = vpop.f32.mrb[0].mxu0
    %v2046 = vadd.f32 %v1838, %v2045
    %v2047 = vpop.f32.mrb[0].mxu0
    %2048 = vdwg.mxu0
    %2049 = vmatprep.subr.mxu0 0.0
    %2050 = vmatpush1.xpose.msra.mxu0 %v1280
    %2051 = vmatprep.subr.mxu0 0.0
    %2052 = vmatpush1.xpose.msra.mxu0 %v1281
    %2053 = vmatprep.subr.mxu0 0.0
    %2054 = vmatpush1.xpose.msra.mxu0 %v1282
    %2055 = vmatprep.subr.mxu0 0.0
    %2056 = vmatpush1.xpose.msra.mxu0 %v1283
    %2057 = vmatprep.subr.mxu0 0.0
    %2058 = vmatpush1.xpose.msra.mxu0 %v1284
    %2059 = vmatprep.subr.mxu0 0.0
    %2060 = vmatpush1.xpose.msra.mxu0 %v1285
    %2061 = vmatprep.subr.mxu0 0.0
    %2062 = vmatpush1.xpose.msra.mxu0 %v1286
    %2063 = vmatprep.subr.mxu0 0.0
    %2064 = vmatpush1.xpose.msra.mxu0 %v1287
    %2065 = vmatprep.subr.mxu0 0.0
    %2066 = vmatpush1.xpose.msra.mxu0 %v1288
    %2067 = vmatprep.subr.mxu0 0.0
    %2068 = vmatpush1.xpose.msra.mxu0 %v1289
    %2069 = vmatprep.subr.mxu0 0.0
    %2070 = vmatpush1.xpose.msra.mxu0 %v1290
    %2071 = vmatprep.subr.mxu0 0.0
    %2072 = vmatpush1.xpose.msra.mxu0 %v1291
    %2073 = vmatprep.subr.mxu0 0.0
    %2074 = vmatpush1.xpose.msra.mxu0 %v1292
    %2075 = vmatprep.subr.mxu0 0.0
    %2076 = vmatpush1.xpose.msra.mxu0 %v1293
    %2077 = vmatprep.subr.mxu0 0.0
    %2078 = vmatpush1.xpose.msra.mxu0 %v1294
    %2079 = vmatprep.subr.mxu0 0.0
    %2080 = vmatpush1.xpose.msra.mxu0 %v1295
    %2081 = vmatprep.subr.mxu0 0.0
    %2082 = vmatpush1.xpose.msra.mxu0 0.0
    %2083 = vmatprep.subr.mxu0 0.0
    %2084 = vmatpush1.xpose.msra.mxu0 0.0
    %2085 = vmatprep.subr.mxu0 0.0
    %2086 = vmatpush1.xpose.msra.mxu0 0.0
    %2087 = vmatprep.subr.mxu0 0.0
    %2088 = vmatpush1.xpose.msra.mxu0 0.0
    %2089 = vmatprep.subr.mxu0 0.0
    %2090 = vmatpush1.xpose.msra.mxu0 0.0
    %2091 = vmatprep.subr.mxu0 0.0
    %2092 = vmatpush1.xpose.msra.mxu0 0.0
    %2093 = vmatprep.subr.mxu0 0.0
    %2094 = vmatpush1.xpose.msra.mxu0 0.0
    %2095 = vmatprep.subr.mxu0 0.0
    %2096 = vmatpush1.xpose.msra.mxu0 0.0
    %2097 = vmatprep.subr.mxu0 0.0
    %2098 = vmatpush1.xpose.msra.mxu0 0.0
    %2099 = vmatprep.subr.mxu0 0.0
    %2100 = vmatpush1.xpose.msra.mxu0 0.0
    %2101 = vmatprep.subr.mxu0 0.0
    %2102 = vmatpush1.xpose.msra.mxu0 0.0
    %2103 = vmatprep.subr.mxu0 0.0
    %2104 = vmatpush1.xpose.msra.mxu0 0.0
    %2105 = vmatprep.subr.mxu0 0.0
    %2106 = vmatpush1.xpose.msra.mxu0 0.0
    %2107 = vmatprep.subr.mxu0 0.0
    %2108 = vmatpush1.xpose.msra.mxu0 0.0
    %2109 = vmatprep.subr.mxu0 0.0
    %2110 = vmatpush1.xpose.msra.mxu0 0.0
    %2111 = vmatprep.subr.mxu0 0.0
    %2112 = vmatpush1.xpose.msra.mxu0 0.0
    %2113 = vmatprep.mubr.f32.mxu0 0.0
    %2114 = vmatmul.mubr.f32.gmra.mrb[0].mxu0 %v1827
    %v2115 = vpop.f32.mrb[0].mxu0
    %v2116 = vadd.f32 %v1838, %v2115
    %v2117 = vpop.f32.mrb[0].mxu0
    %2118 = vdwg.mxu0
    %v2120 = vrot.slane %v1976, 7
    %v2123 = vrot.slane %v2046, 6
    %v2126 = vrot.slane %v2116, 5
    %vm2128 = vcmask 1040384
    %v2129 = vsel %vm2128, %v1906, %v2120
    %vm2130 = vcmask 1041408
    %v2131 = vsel %vm2130, %v2129, %v2123
    %vm2132 = vcmask 1042432
    %v2133 = vsel %vm2132, %v2131, %v2126
    %2134 = vst [vmem:[#allocation8] sm:$0xf] %v2133
    // Predicated region
    $region54: #{tpu_custom_call.1} parent=1 // pred_check
      _
    $region55: #{tpu_custom_call.1} parent=1 // pred_check_branch
      %2136 = sbr.rel (0) target = $region57
    $region56: #{tpu_custom_call.1} parent=1 // pred_region
      %s2138 = ssub.s32 64, 64
      %2139 = vsyncadd [#allocation7], %s2138
      %s2141 = sshll.u32 [#allocation8], 4
      %s2142 = int_to_ptr.vmem [resolvable:$true] %s2141
      %2144 = dma.vmem_to_hbm [thread:$0]  %s2142, 64, %s12, [#allocation7]
    $region57: #{tpu_custom_call.1} parent=1 // pred_fallthru
      _
    // Predicated region
    $region58: #{tpu_custom_call.1} parent=1 // pred_check
      _
    $region59: #{tpu_custom_call.1} parent=1 // pred_check_branch
      %2146 = sbr.rel (0) target = $region61
    $region60: #{tpu_custom_call.1} parent=1 // pred_region
      %2147 = dma.done [#allocation7], 64
    $region61: #{tpu_custom_call.1} parent=1 // pred_fallthru
      _
    %2148 = vsyncpa [#allocation6], 1
    %2149 = vsyncpa [#allocation7], 1

</llo_original>
